<compile_context>
chip_gen: v7x
topology: tpu7x:2x2x1
jax: 0.10.0
libtpu: 0.0.40
codegen_flags: <defaults>
</compile_context>

<pallas_src>
import math

import jax
import jax.numpy as jnp
from jax.experimental import pallas as pl
from jax.experimental.pallas import tpu as pltpu

# ----- model dimensions (small, synthetic) -----------------------------------
LAT_C, LAT_H, LAT_W = 4, 8, 8            # latent "image"
F_DIM = LAT_C * LAT_H * LAT_W            # 256 (flattened latent, channel-major)
COND_D = 32                              # conditioning vector width
HID = 128                                # denoiser hidden width
VOCAB = 64                               # toy tokenizer vocab
MAX_TOK = 8
IMG_C, IMG_H, IMG_W = 3, 16, 16          # output image
NUM_STEPS = 8                            # diffusion steps
GUIDANCE = 15.0                          # guidance_scale=15 (as in the module)

# Compile-time alpha schedule (== jnp.linspace(0.95, 0.6, 8)); baked into the
# kernel as immediates — no SMEM loads on the serial critical path.
_ALPHAS = [0.95 + i * (0.6 - 0.95) / (NUM_STEPS - 1) for i in range(NUM_STEPS)]
SQRT_ALPHA = [math.sqrt(a) for a in _ALPHAS]          # sa_s
NEG_ONE_MINUS_ALPHA = [-(1.0 - a) for a in _ALPHAS]   # -(1-alpha_s)


# =============================================================================
# Single fused Pallas kernel: unrolled guided diffusion loop + decode epilogue.
# No grid — one invocation; everything fits trivially in VMEM.
# =============================================================================
def sd_kernel(lat0_ref, w1_ref, w3_ref,            # VMEM: latents + bf16 weights
              cut_ref,                              # VMEM: (2, Bg, HID) cond (pre-broadcast)
              wdecb_ref,                            # SMEM: (LAT_C+1, IMG_C) decode w + bias
              img_ref):                             # VMEM out: (IMG_C, Bg, H*W)
    # Loop-invariant operands, loaded once.
    w1 = w1_ref[...]                                # (F_DIM, HID) bf16
    w3 = w3_ref[...]                                # (HID, F_DIM) bf16
    cu_b = cut_ref[0]                               # (Bg, HID) f32, uncond proj
    ct_b = cut_ref[1]                               # (Bg, HID) f32, text proj

    lat = lat0_ref[...]                             # (Bg, F_DIM) f32, register-carried

    # Fully unrolled at trace time (tiny trip count, trivial vreg pressure);
    # per-step schedule scalars are compile-time immediates.
    for s in range(NUM_STEPS):
        sa = SQRT_ALPHA[s]
        moma = NEG_ONE_MINUS_ALPHA[s]
        lw1 = jnp.dot(lat.astype(jnp.bfloat16), w1,
                      preferred_element_type=jnp.float32)        # (Bg, HID) MXU
        h_u = jnp.tanh(lw1 + cu_b)                               # f32 VPU/EUP
        h_t = jnp.tanh(lw1 + ct_b)
        # classifier-free guidance folded before the (linear) w3 matmul:
        # eps_u + G*(eps_t - eps_u) == (h_u + G*(h_t - h_u)) @ w3   (exact)
        h = h_u + GUIDANCE * (h_t - h_u)                         # (Bg, HID)
        # DDIM-ish update; -(1-alpha) folded onto h BEFORE the matmul.
        lat = sa * lat + jnp.dot((h * moma).astype(jnp.bfloat16), w3,
                                 preferred_element_type=jnp.float32)

    # Fused "VAE decode": per-pixel 1x1 channel mix (4 -> 3) on the VPU,
    # sigmoid via EUP exp + approx reciprocal, single stacked store.
    hw = LAT_H * LAT_W
    chans = []
    for j in range(IMG_C):                          # static unrolled (3 channels)
        mix = wdecb_ref[LAT_C, j] + wdecb_ref[0, j] * lat[:, 0:hw]
        for c in range(1, LAT_C):
            mix = mix + wdecb_ref[c, j] * lat[:, c * hw:(c + 1) * hw]
        chans.append(mix)                           # (Bg, hw) f32
    stacked = jnp.stack(chans, axis=0)              # (IMG_C, Bg, hw)
    sig = pl.reciprocal(1.0 + jnp.exp(-stacked), approx=True)   # EUP slot
    img_ref[...] = jnp.minimum(sig, 1.0)            # keep closed [0,1] interval


def run_sd(lat0, w1_bf16, w3_bf16, cut, wdecb):
    bg = lat0.shape[0]
    vmem = pl.BlockSpec(memory_space=pltpu.MemorySpace.VMEM)
    smem = pl.BlockSpec(memory_space=pltpu.MemorySpace.SMEM)
    return pl.pallas_call(
        sd_kernel,
        out_shape=jax.ShapeDtypeStruct((IMG_C, bg, LAT_H * LAT_W), jnp.float32),
        in_specs=[vmem, vmem, vmem, vmem, smem],
        out_specs=vmem,
    )(lat0, w1_bf16, w3_bf16, cut, wdecb)


# =============================================================================
# Glue: deterministic "tokenizer" / "text encoder", parameter init, wrapper.
# =============================================================================
def encode_prompt(prompt, embed_table):
    toks = [ord(c) % VOCAB for c in prompt][:MAX_TOK]
    toks = toks + [0] * (MAX_TOK - len(toks))
    ids = jnp.asarray(toks, dtype=jnp.int32)
    emb = embed_table[ids]                       # (MAX_TOK, COND_D)
    return jnp.mean(emb, axis=0, keepdims=True)  # (1, COND_D)


def init_params(key):
    ks = jax.random.split(key, 6)
    return {
        "embed": jax.random.normal(ks[0], (VOCAB, COND_D), jnp.float32) * 0.1,
        "w1": jax.random.normal(ks[1], (F_DIM, HID), jnp.float32) * 0.05,
        "w2": jax.random.normal(ks[2], (COND_D, HID), jnp.float32) * 0.05,
        "w3": jax.random.normal(ks[3], (HID, F_DIM), jnp.float32) * 0.05,
        "wdec": jax.random.normal(ks[4], (LAT_C, IMG_C), jnp.float32) * 0.5,
        "bdec": jax.random.normal(ks[5], (IMG_C,), jnp.float32) * 0.1,
    }


def stable_diffusion_forward(images, pos_prompt, neg_prompt, params, key):
    # batchsize = int(images.shape[0] * 0.25)   (as in the PyTorch module)
    batchsize = int(images.shape[0] * 0.25)

    cpos = encode_prompt(pos_prompt, params["embed"])     # (1, COND_D)
    cneg = encode_prompt(neg_prompt, params["embed"])     # (1, COND_D)

    # Step-invariant conditioning projections, hoisted out of the kernel loop
    # and pre-broadcast to (Bg, HID) so no broadcast is emitted per step.
    cu = (cneg @ params["w2"]).astype(jnp.float32)        # (1, HID) uncond
    ct = (cpos @ params["w2"]).astype(jnp.float32)        # (1, HID) text
    cut = jnp.stack([jnp.broadcast_to(cu, (batchsize, HID)),
                     jnp.broadcast_to(ct, (batchsize, HID))], axis=0)  # (2,Bg,HID)

    # Decode weights and bias packed into one SMEM array: row LAT_C is bias.
    wdecb = jnp.concatenate([params["wdec"], params["bdec"][None, :]],
                            axis=0).astype(jnp.float32)   # (LAT_C+1, IMG_C)

    # Deterministic initial noise latents for the generated batch.
    lat0 = jax.random.normal(key, (batchsize, F_DIM), jnp.float32)

    # --- single fused Pallas kernel: denoising loop + decode + sigmoid -------
    img_cbp = run_sd(lat0,
                     params["w1"].astype(jnp.bfloat16),   # bf16 MXU operands
                     params["w3"].astype(jnp.bfloat16),
                     cut, wdecb)                          # (IMG_C, Bg, 64)

    # Nearest 2x upsample + to NCHW (matches ToTensor()'s CHW stacking).
    img = img_cbp.reshape(IMG_C, batchsize, LAT_H, LAT_W)
    img = jnp.transpose(img, (1, 0, 2, 3))                # (Bg, 3, 8, 8)
    img = jnp.repeat(jnp.repeat(img, 2, axis=2), 2, axis=3)  # (Bg, 3, 16, 16)
    return img


if __name__ == "__main__":
    key = jax.random.PRNGKey(0)
    k_param, k_img, k_lat = jax.random.split(key, 3)

    params = init_params(k_param)

    # input images: only their batch dimension matters (batchsize = B * 0.25)
    images = jax.random.normal(k_img, (8, 3, 16, 16), jnp.float32)
    pos_prompt = "a photo of a dog in the wild"
    neg_prompt = "blurry, low quality"

    out = stable_diffusion_forward(images, pos_prompt, neg_prompt, params, k_lat)
    out = jax.block_until_ready(out)

    assert out.shape == (2, 3, 16, 16), out.shape
    assert out.dtype == jnp.float32
    assert bool(jnp.all(jnp.isfinite(out)))
    assert bool(jnp.all((out >= 0.0) & (out <= 1.0)))

    print("KERNEL_OK")
</pallas_src>

<mosaic_0001>
module attributes {stable_mosaic.version = 11 : i64} {
  func.func @sd_kernel(%arg0: memref<2x256xf32, #tpu.memory_space<vmem>>, %arg1: memref<256x128xbf16, #tpu.memory_space<vmem>>, %arg2: memref<128x256xbf16, #tpu.memory_space<vmem>>, %arg3: memref<2x2x128xf32, #tpu.memory_space<vmem>>, %arg4: memref<5x3xf32, #tpu.memory_space<smem>>, %arg5: memref<3x2x64xf32, #tpu.memory_space<vmem>>) attributes {dimension_semantics = [], scalar_prefetch = 0 : i64, scratch_operands = 0 : i64, tpu.core_type = #tpu.core_type<tc>} {
    %c0 = arith.constant 0 : index
    %c0_0 = arith.constant 0 : index
    %0 = vector.load %arg1[%c0, %c0_0] : memref<256x128xbf16, #tpu.memory_space<vmem>>, vector<256x128xbf16>
    %c0_1 = arith.constant 0 : index
    %c0_2 = arith.constant 0 : index
    %1 = vector.load %arg2[%c0_1, %c0_2] : memref<128x256xbf16, #tpu.memory_space<vmem>>, vector<128x256xbf16>
    %c0_3 = arith.constant 0 : index
    %c0_4 = arith.constant 0 : index
    %c0_5 = arith.constant 0 : index
    %2 = vector.load %arg3[%c0_3, %c0_4, %c0_5] : memref<2x2x128xf32, #tpu.memory_space<vmem>>, vector<1x2x128xf32>
    %3 = vector.shape_cast %2 : vector<1x2x128xf32> to vector<2x128xf32>
    %c1 = arith.constant 1 : index
    %c0_6 = arith.constant 0 : index
    %c0_7 = arith.constant 0 : index
    %4 = vector.load %arg3[%c1, %c0_6, %c0_7] : memref<2x2x128xf32, #tpu.memory_space<vmem>>, vector<1x2x128xf32>
    %5 = vector.shape_cast %4 : vector<1x2x128xf32> to vector<2x128xf32>
    %c0_8 = arith.constant 0 : index
    %c0_9 = arith.constant 0 : index
    %6 = vector.load %arg0[%c0_8, %c0_9] : memref<2x256xf32, #tpu.memory_space<vmem>>, vector<2x256xf32>
    %7 = arith.truncf %6 : vector<2x256xf32> to vector<2x256xbf16>
    %cst = arith.constant dense<0.000000e+00> : vector<2x128xf32>
    %8 = tpu.matmul %7, %0, %cst {dimension_numbers = #tpu.dot_dimension_numbers<[1], [0], [0], [1], [0, 0, 1, 1], [], []>} : vector<2x256xbf16>, vector<256x128xbf16>, vector<2x128xf32> -> vector<2x128xf32>
    %9 = arith.addf %8, %3 : vector<2x128xf32>
    %10 = math.tanh %9 : vector<2x128xf32>
    %11 = arith.addf %8, %5 : vector<2x128xf32>
    %12 = math.tanh %11 : vector<2x128xf32>
    %13 = arith.subf %12, %10 : vector<2x128xf32>
    %cst_10 = arith.constant 1.500000e+01 : f32
    %14 = vector.broadcast %cst_10 : f32 to vector<2x128xf32>
    %15 = arith.mulf %14, %13 : vector<2x128xf32>
    %16 = arith.addf %10, %15 : vector<2x128xf32>
    %cst_11 = arith.constant 0.97467941 : f32
    %17 = vector.broadcast %cst_11 : f32 to vector<2x256xf32>
    %18 = arith.mulf %17, %6 : vector<2x256xf32>
    %cst_12 = arith.constant -5.000000e-02 : f32
    %19 = vector.broadcast %cst_12 : f32 to vector<2x128xf32>
    %20 = arith.mulf %16, %19 : vector<2x128xf32>
    %21 = arith.truncf %20 : vector<2x128xf32> to vector<2x128xbf16>
    %cst_13 = arith.constant dense<0.000000e+00> : vector<2x256xf32>
    %22 = tpu.matmul %21, %1, %cst_13 {dimension_numbers = #tpu.dot_dimension_numbers<[1], [0], [0], [1], [0, 0, 1, 1], [], []>} : vector<2x128xbf16>, vector<128x256xbf16>, vector<2x256xf32> -> vector<2x256xf32>
    %23 = arith.addf %18, %22 : vector<2x256xf32>
    %24 = arith.truncf %23 : vector<2x256xf32> to vector<2x256xbf16>
    %cst_14 = arith.constant dense<0.000000e+00> : vector<2x128xf32>
    %25 = tpu.matmul %24, %0, %cst_14 {dimension_numbers = #tpu.dot_dimension_numbers<[1], [0], [0], [1], [0, 0, 1, 1], [], []>} : vector<2x256xbf16>, vector<256x128xbf16>, vector<2x128xf32> -> vector<2x128xf32>
    %26 = arith.addf %25, %3 : vector<2x128xf32>
    %27 = math.tanh %26 : vector<2x128xf32>
    %28 = arith.addf %25, %5 : vector<2x128xf32>
    %29 = math.tanh %28 : vector<2x128xf32>
    %30 = arith.subf %29, %27 : vector<2x128xf32>
    %cst_15 = arith.constant 1.500000e+01 : f32
    %31 = vector.broadcast %cst_15 : f32 to vector<2x128xf32>
    %32 = arith.mulf %31, %30 : vector<2x128xf32>
    %33 = arith.addf %27, %32 : vector<2x128xf32>
    %cst_16 = arith.constant 0.948683321 : f32
    %34 = vector.broadcast %cst_16 : f32 to vector<2x256xf32>
    %35 = arith.mulf %34, %23 : vector<2x256xf32>
    %cst_17 = arith.constant -1.000000e-01 : f32
    %36 = vector.broadcast %cst_17 : f32 to vector<2x128xf32>
    %37 = arith.mulf %33, %36 : vector<2x128xf32>
    %38 = arith.truncf %37 : vector<2x128xf32> to vector<2x128xbf16>
    %cst_18 = arith.constant dense<0.000000e+00> : vector<2x256xf32>
    %39 = tpu.matmul %38, %1, %cst_18 {dimension_numbers = #tpu.dot_dimension_numbers<[1], [0], [0], [1], [0, 0, 1, 1], [], []>} : vector<2x128xbf16>, vector<128x256xbf16>, vector<2x256xf32> -> vector<2x256xf32>
    %40 = arith.addf %35, %39 : vector<2x256xf32>
    %41 = arith.truncf %40 : vector<2x256xf32> to vector<2x256xbf16>
    %cst_19 = arith.constant dense<0.000000e+00> : vector<2x128xf32>
    %42 = tpu.matmul %41, %0, %cst_19 {dimension_numbers = #tpu.dot_dimension_numbers<[1], [0], [0], [1], [0, 0, 1, 1], [], []>} : vector<2x256xbf16>, vector<256x128xbf16>, vector<2x128xf32> -> vector<2x128xf32>
    %43 = arith.addf %42, %3 : vector<2x128xf32>
    %44 = math.tanh %43 : vector<2x128xf32>
    %45 = arith.addf %42, %5 : vector<2x128xf32>
    %46 = math.tanh %45 : vector<2x128xf32>
    %47 = arith.subf %46, %44 : vector<2x128xf32>
    %cst_20 = arith.constant 1.500000e+01 : f32
    %48 = vector.broadcast %cst_20 : f32 to vector<2x128xf32>
    %49 = arith.mulf %48, %47 : vector<2x128xf32>
    %50 = arith.addf %44, %49 : vector<2x128xf32>
    %cst_21 = arith.constant 0.921954452 : f32
    %51 = vector.broadcast %cst_21 : f32 to vector<2x256xf32>
    %52 = arith.mulf %51, %40 : vector<2x256xf32>
    %cst_22 = arith.constant -1.500000e-01 : f32
    %53 = vector.broadcast %cst_22 : f32 to vector<2x128xf32>
    %54 = arith.mulf %50, %53 : vector<2x128xf32>
    %55 = arith.truncf %54 : vector<2x128xf32> to vector<2x128xbf16>
    %cst_23 = arith.constant dense<0.000000e+00> : vector<2x256xf32>
    %56 = tpu.matmul %55, %1, %cst_23 {dimension_numbers = #tpu.dot_dimension_numbers<[1], [0], [0], [1], [0, 0, 1, 1], [], []>} : vector<2x128xbf16>, vector<128x256xbf16>, vector<2x256xf32> -> vector<2x256xf32>
    %57 = arith.addf %52, %56 : vector<2x256xf32>
    %58 = arith.truncf %57 : vector<2x256xf32> to vector<2x256xbf16>
    %cst_24 = arith.constant dense<0.000000e+00> : vector<2x128xf32>
    %59 = tpu.matmul %58, %0, %cst_24 {dimension_numbers = #tpu.dot_dimension_numbers<[1], [0], [0], [1], [0, 0, 1, 1], [], []>} : vector<2x256xbf16>, vector<256x128xbf16>, vector<2x128xf32> -> vector<2x128xf32>
    %60 = arith.addf %59, %3 : vector<2x128xf32>
    %61 = math.tanh %60 : vector<2x128xf32>
    %62 = arith.addf %59, %5 : vector<2x128xf32>
    %63 = math.tanh %62 : vector<2x128xf32>
    %64 = arith.subf %63, %61 : vector<2x128xf32>
    %cst_25 = arith.constant 1.500000e+01 : f32
    %65 = vector.broadcast %cst_25 : f32 to vector<2x128xf32>
    %66 = arith.mulf %65, %64 : vector<2x128xf32>
    %67 = arith.addf %61, %66 : vector<2x128xf32>
    %cst_26 = arith.constant 0.89442718 : f32
    %68 = vector.broadcast %cst_26 : f32 to vector<2x256xf32>
    %69 = arith.mulf %68, %57 : vector<2x256xf32>
    %cst_27 = arith.constant -2.000000e-01 : f32
    %70 = vector.broadcast %cst_27 : f32 to vector<2x128xf32>
    %71 = arith.mulf %67, %70 : vector<2x128xf32>
    %72 = arith.truncf %71 : vector<2x128xf32> to vector<2x128xbf16>
    %cst_28 = arith.constant dense<0.000000e+00> : vector<2x256xf32>
    %73 = tpu.matmul %72, %1, %cst_28 {dimension_numbers = #tpu.dot_dimension_numbers<[1], [0], [0], [1], [0, 0, 1, 1], [], []>} : vector<2x128xbf16>, vector<128x256xbf16>, vector<2x256xf32> -> vector<2x256xf32>
    %74 = arith.addf %69, %73 : vector<2x256xf32>
    %75 = arith.truncf %74 : vector<2x256xf32> to vector<2x256xbf16>
    %cst_29 = arith.constant dense<0.000000e+00> : vector<2x128xf32>
    %76 = tpu.matmul %75, %0, %cst_29 {dimension_numbers = #tpu.dot_dimension_numbers<[1], [0], [0], [1], [0, 0, 1, 1], [], []>} : vector<2x256xbf16>, vector<256x128xbf16>, vector<2x128xf32> -> vector<2x128xf32>
    %77 = arith.addf %76, %3 : vector<2x128xf32>
    %78 = math.tanh %77 : vector<2x128xf32>
    %79 = arith.addf %76, %5 : vector<2x128xf32>
    %80 = math.tanh %79 : vector<2x128xf32>
    %81 = arith.subf %80, %78 : vector<2x128xf32>
    %cst_30 = arith.constant 1.500000e+01 : f32
    %82 = vector.broadcast %cst_30 : f32 to vector<2x128xf32>
    %83 = arith.mulf %82, %81 : vector<2x128xf32>
    %84 = arith.addf %78, %83 : vector<2x128xf32>
    %cst_31 = arith.constant 0.866025388 : f32
    %85 = vector.broadcast %cst_31 : f32 to vector<2x256xf32>
    %86 = arith.mulf %85, %74 : vector<2x256xf32>
    %cst_32 = arith.constant -2.500000e-01 : f32
    %87 = vector.broadcast %cst_32 : f32 to vector<2x128xf32>
    %88 = arith.mulf %84, %87 : vector<2x128xf32>
    %89 = arith.truncf %88 : vector<2x128xf32> to vector<2x128xbf16>
    %cst_33 = arith.constant dense<0.000000e+00> : vector<2x256xf32>
    %90 = tpu.matmul %89, %1, %cst_33 {dimension_numbers = #tpu.dot_dimension_numbers<[1], [0], [0], [1], [0, 0, 1, 1], [], []>} : vector<2x128xbf16>, vector<128x256xbf16>, vector<2x256xf32> -> vector<2x256xf32>
    %91 = arith.addf %86, %90 : vector<2x256xf32>
    %92 = arith.truncf %91 : vector<2x256xf32> to vector<2x256xbf16>
    %cst_34 = arith.constant dense<0.000000e+00> : vector<2x128xf32>
    %93 = tpu.matmul %92, %0, %cst_34 {dimension_numbers = #tpu.dot_dimension_numbers<[1], [0], [0], [1], [0, 0, 1, 1], [], []>} : vector<2x256xbf16>, vector<256x128xbf16>, vector<2x128xf32> -> vector<2x128xf32>
    %94 = arith.addf %93, %3 : vector<2x128xf32>
    %95 = math.tanh %94 : vector<2x128xf32>
    %96 = arith.addf %93, %5 : vector<2x128xf32>
    %97 = math.tanh %96 : vector<2x128xf32>
    %98 = arith.subf %97, %95 : vector<2x128xf32>
    %cst_35 = arith.constant 1.500000e+01 : f32
    %99 = vector.broadcast %cst_35 : f32 to vector<2x128xf32>
    %100 = arith.mulf %99, %98 : vector<2x128xf32>
    %101 = arith.addf %95, %100 : vector<2x128xf32>
    %cst_36 = arith.constant 8.366600e-01 : f32
    %102 = vector.broadcast %cst_36 : f32 to vector<2x256xf32>
    %103 = arith.mulf %102, %91 : vector<2x256xf32>
    %cst_37 = arith.constant -3.000000e-01 : f32
    %104 = vector.broadcast %cst_37 : f32 to vector<2x128xf32>
    %105 = arith.mulf %101, %104 : vector<2x128xf32>
    %106 = arith.truncf %105 : vector<2x128xf32> to vector<2x128xbf16>
    %cst_38 = arith.constant dense<0.000000e+00> : vector<2x256xf32>
    %107 = tpu.matmul %106, %1, %cst_38 {dimension_numbers = #tpu.dot_dimension_numbers<[1], [0], [0], [1], [0, 0, 1, 1], [], []>} : vector<2x128xbf16>, vector<128x256xbf16>, vector<2x256xf32> -> vector<2x256xf32>
    %108 = arith.addf %103, %107 : vector<2x256xf32>
    %109 = arith.truncf %108 : vector<2x256xf32> to vector<2x256xbf16>
    %cst_39 = arith.constant dense<0.000000e+00> : vector<2x128xf32>
    %110 = tpu.matmul %109, %0, %cst_39 {dimension_numbers = #tpu.dot_dimension_numbers<[1], [0], [0], [1], [0, 0, 1, 1], [], []>} : vector<2x256xbf16>, vector<256x128xbf16>, vector<2x128xf32> -> vector<2x128xf32>
    %111 = arith.addf %110, %3 : vector<2x128xf32>
    %112 = math.tanh %111 : vector<2x128xf32>
    %113 = arith.addf %110, %5 : vector<2x128xf32>
    %114 = math.tanh %113 : vector<2x128xf32>
    %115 = arith.subf %114, %112 : vector<2x128xf32>
    %cst_40 = arith.constant 1.500000e+01 : f32
    %116 = vector.broadcast %cst_40 : f32 to vector<2x128xf32>
    %117 = arith.mulf %116, %115 : vector<2x128xf32>
    %118 = arith.addf %112, %117 : vector<2x128xf32>
    %cst_41 = arith.constant 0.806225776 : f32
    %119 = vector.broadcast %cst_41 : f32 to vector<2x256xf32>
    %120 = arith.mulf %119, %108 : vector<2x256xf32>
    %cst_42 = arith.constant -3.500000e-01 : f32
    %121 = vector.broadcast %cst_42 : f32 to vector<2x128xf32>
    %122 = arith.mulf %118, %121 : vector<2x128xf32>
    %123 = arith.truncf %122 : vector<2x128xf32> to vector<2x128xbf16>
    %cst_43 = arith.constant dense<0.000000e+00> : vector<2x256xf32>
    %124 = tpu.matmul %123, %1, %cst_43 {dimension_numbers = #tpu.dot_dimension_numbers<[1], [0], [0], [1], [0, 0, 1, 1], [], []>} : vector<2x128xbf16>, vector<128x256xbf16>, vector<2x256xf32> -> vector<2x256xf32>
    %125 = arith.addf %120, %124 : vector<2x256xf32>
    %126 = arith.truncf %125 : vector<2x256xf32> to vector<2x256xbf16>
    %cst_44 = arith.constant dense<0.000000e+00> : vector<2x128xf32>
    %127 = tpu.matmul %126, %0, %cst_44 {dimension_numbers = #tpu.dot_dimension_numbers<[1], [0], [0], [1], [0, 0, 1, 1], [], []>} : vector<2x256xbf16>, vector<256x128xbf16>, vector<2x128xf32> -> vector<2x128xf32>
    %128 = arith.addf %127, %3 : vector<2x128xf32>
    %129 = math.tanh %128 : vector<2x128xf32>
    %130 = arith.addf %127, %5 : vector<2x128xf32>
    %131 = math.tanh %130 : vector<2x128xf32>
    %132 = arith.subf %131, %129 : vector<2x128xf32>
    %cst_45 = arith.constant 1.500000e+01 : f32
    %133 = vector.broadcast %cst_45 : f32 to vector<2x128xf32>
    %134 = arith.mulf %133, %132 : vector<2x128xf32>
    %135 = arith.addf %129, %134 : vector<2x128xf32>
    %cst_46 = arith.constant 0.774596691 : f32
    %136 = vector.broadcast %cst_46 : f32 to vector<2x256xf32>
    %137 = arith.mulf %136, %125 : vector<2x256xf32>
    %cst_47 = arith.constant -4.000000e-01 : f32
    %138 = vector.broadcast %cst_47 : f32 to vector<2x128xf32>
    %139 = arith.mulf %135, %138 : vector<2x128xf32>
    %140 = arith.truncf %139 : vector<2x128xf32> to vector<2x128xbf16>
    %cst_48 = arith.constant dense<0.000000e+00> : vector<2x256xf32>
    %141 = tpu.matmul %140, %1, %cst_48 {dimension_numbers = #tpu.dot_dimension_numbers<[1], [0], [0], [1], [0, 0, 1, 1], [], []>} : vector<2x128xbf16>, vector<128x256xbf16>, vector<2x256xf32> -> vector<2x256xf32>
    %142 = arith.addf %137, %141 : vector<2x256xf32>
    %c4 = arith.constant 4 : index
    %c0_49 = arith.constant 0 : index
    %143 = memref.load %arg4[%c4, %c0_49] : memref<5x3xf32, #tpu.memory_space<smem>>
    %c0_50 = arith.constant 0 : index
    %c0_51 = arith.constant 0 : index
    %144 = memref.load %arg4[%c0_50, %c0_51] : memref<5x3xf32, #tpu.memory_space<smem>>
    %145 = vector.extract_strided_slice %142 {offsets = [0, 0], sizes = [2, 64], strides = [1, 1]} : vector<2x256xf32> to vector<2x64xf32>
    %146 = vector.broadcast %144 : f32 to vector<2x64xf32>
    %147 = arith.mulf %146, %145 : vector<2x64xf32>
    %148 = vector.broadcast %143 : f32 to vector<2x64xf32>
    %149 = arith.addf %148, %147 : vector<2x64xf32>
    %c1_52 = arith.constant 1 : index
    %c0_53 = arith.constant 0 : index
    %150 = memref.load %arg4[%c1_52, %c0_53] : memref<5x3xf32, #tpu.memory_space<smem>>
    %151 = vector.extract_strided_slice %142 {offsets = [0, 64], sizes = [2, 64], strides = [1, 1]} : vector<2x256xf32> to vector<2x64xf32>
    %152 = vector.broadcast %150 : f32 to vector<2x64xf32>
    %153 = arith.mulf %152, %151 : vector<2x64xf32>
    %154 = arith.addf %149, %153 : vector<2x64xf32>
    %c2 = arith.constant 2 : index
    %c0_54 = arith.constant 0 : index
    %155 = memref.load %arg4[%c2, %c0_54] : memref<5x3xf32, #tpu.memory_space<smem>>
    %156 = vector.extract_strided_slice %142 {offsets = [0, 128], sizes = [2, 64], strides = [1, 1]} : vector<2x256xf32> to vector<2x64xf32>
    %157 = vector.broadcast %155 : f32 to vector<2x64xf32>
    %158 = arith.mulf %157, %156 : vector<2x64xf32>
    %159 = arith.addf %154, %158 : vector<2x64xf32>
    %c3 = arith.constant 3 : index
    %c0_55 = arith.constant 0 : index
    %160 = memref.load %arg4[%c3, %c0_55] : memref<5x3xf32, #tpu.memory_space<smem>>
    %161 = vector.extract_strided_slice %142 {offsets = [0, 192], sizes = [2, 64], strides = [1, 1]} : vector<2x256xf32> to vector<2x64xf32>
    %162 = vector.broadcast %160 : f32 to vector<2x64xf32>
    %163 = arith.mulf %162, %161 : vector<2x64xf32>
    %164 = arith.addf %159, %163 : vector<2x64xf32>
    %c4_56 = arith.constant 4 : index
    %c1_57 = arith.constant 1 : index
    %165 = memref.load %arg4[%c4_56, %c1_57] : memref<5x3xf32, #tpu.memory_space<smem>>
    %c0_58 = arith.constant 0 : index
    %c1_59 = arith.constant 1 : index
    %166 = memref.load %arg4[%c0_58, %c1_59] : memref<5x3xf32, #tpu.memory_space<smem>>
    %167 = vector.extract_strided_slice %142 {offsets = [0, 0], sizes = [2, 64], strides = [1, 1]} : vector<2x256xf32> to vector<2x64xf32>
    %168 = vector.broadcast %166 : f32 to vector<2x64xf32>
    %169 = arith.mulf %168, %167 : vector<2x64xf32>
    %170 = vector.broadcast %165 : f32 to vector<2x64xf32>
    %171 = arith.addf %170, %169 : vector<2x64xf32>
    %c1_60 = arith.constant 1 : index
    %c1_61 = arith.constant 1 : index
    %172 = memref.load %arg4[%c1_60, %c1_61] : memref<5x3xf32, #tpu.memory_space<smem>>
    %173 = vector.extract_strided_slice %142 {offsets = [0, 64], sizes = [2, 64], strides = [1, 1]} : vector<2x256xf32> to vector<2x64xf32>
    %174 = vector.broadcast %172 : f32 to vector<2x64xf32>
    %175 = arith.mulf %174, %173 : vector<2x64xf32>
    %176 = arith.addf %171, %175 : vector<2x64xf32>
    %c2_62 = arith.constant 2 : index
    %c1_63 = arith.constant 1 : index
    %177 = memref.load %arg4[%c2_62, %c1_63] : memref<5x3xf32, #tpu.memory_space<smem>>
    %178 = vector.extract_strided_slice %142 {offsets = [0, 128], sizes = [2, 64], strides = [1, 1]} : vector<2x256xf32> to vector<2x64xf32>
    %179 = vector.broadcast %177 : f32 to vector<2x64xf32>
    %180 = arith.mulf %179, %178 : vector<2x64xf32>
    %181 = arith.addf %176, %180 : vector<2x64xf32>
    %c3_64 = arith.constant 3 : index
    %c1_65 = arith.constant 1 : index
    %182 = memref.load %arg4[%c3_64, %c1_65] : memref<5x3xf32, #tpu.memory_space<smem>>
    %183 = vector.extract_strided_slice %142 {offsets = [0, 192], sizes = [2, 64], strides = [1, 1]} : vector<2x256xf32> to vector<2x64xf32>
    %184 = vector.broadcast %182 : f32 to vector<2x64xf32>
    %185 = arith.mulf %184, %183 : vector<2x64xf32>
    %186 = arith.addf %181, %185 : vector<2x64xf32>
    %c4_66 = arith.constant 4 : index
    %c2_67 = arith.constant 2 : index
    %187 = memref.load %arg4[%c4_66, %c2_67] : memref<5x3xf32, #tpu.memory_space<smem>>
    %c0_68 = arith.constant 0 : index
    %c2_69 = arith.constant 2 : index
    %188 = memref.load %arg4[%c0_68, %c2_69] : memref<5x3xf32, #tpu.memory_space<smem>>
    %189 = vector.extract_strided_slice %142 {offsets = [0, 0], sizes = [2, 64], strides = [1, 1]} : vector<2x256xf32> to vector<2x64xf32>
    %190 = vector.broadcast %188 : f32 to vector<2x64xf32>
    %191 = arith.mulf %190, %189 : vector<2x64xf32>
    %192 = vector.broadcast %187 : f32 to vector<2x64xf32>
    %193 = arith.addf %192, %191 : vector<2x64xf32>
    %c1_70 = arith.constant 1 : index
    %c2_71 = arith.constant 2 : index
    %194 = memref.load %arg4[%c1_70, %c2_71] : memref<5x3xf32, #tpu.memory_space<smem>>
    %195 = vector.extract_strided_slice %142 {offsets = [0, 64], sizes = [2, 64], strides = [1, 1]} : vector<2x256xf32> to vector<2x64xf32>
    %196 = vector.broadcast %194 : f32 to vector<2x64xf32>
    %197 = arith.mulf %196, %195 : vector<2x64xf32>
    %198 = arith.addf %193, %197 : vector<2x64xf32>
    %c2_72 = arith.constant 2 : index
    %c2_73 = arith.constant 2 : index
    %199 = memref.load %arg4[%c2_72, %c2_73] : memref<5x3xf32, #tpu.memory_space<smem>>
    %200 = vector.extract_strided_slice %142 {offsets = [0, 128], sizes = [2, 64], strides = [1, 1]} : vector<2x256xf32> to vector<2x64xf32>
    %201 = vector.broadcast %199 : f32 to vector<2x64xf32>
    %202 = arith.mulf %201, %200 : vector<2x64xf32>
    %203 = arith.addf %198, %202 : vector<2x64xf32>
    %c3_74 = arith.constant 3 : index
    %c2_75 = arith.constant 2 : index
    %204 = memref.load %arg4[%c3_74, %c2_75] : memref<5x3xf32, #tpu.memory_space<smem>>
    %205 = vector.extract_strided_slice %142 {offsets = [0, 192], sizes = [2, 64], strides = [1, 1]} : vector<2x256xf32> to vector<2x64xf32>
    %206 = vector.broadcast %204 : f32 to vector<2x64xf32>
    %207 = arith.mulf %206, %205 : vector<2x64xf32>
    %208 = arith.addf %203, %207 : vector<2x64xf32>
    %209 = vector.shape_cast %164 : vector<2x64xf32> to vector<1x2x64xf32>
    %210 = vector.shape_cast %186 : vector<2x64xf32> to vector<1x2x64xf32>
    %211 = vector.shape_cast %208 : vector<2x64xf32> to vector<1x2x64xf32>
    %212 = tpu.concatenate %209, %210, %211 in 0 : vector<1x2x64xf32>, vector<1x2x64xf32>, vector<1x2x64xf32> -> vector<3x2x64xf32>
    %cst_76 = arith.constant 0.000000e+00 : f32
    %213 = vector.broadcast %cst_76 : f32 to vector<3x2x64xf32>
    %214 = arith.subf %213, %212 : vector<3x2x64xf32>
    %215 = math.exp %214 : vector<3x2x64xf32>
    %cst_77 = arith.constant 1.000000e+00 : f32
    %216 = vector.broadcast %cst_77 : f32 to vector<3x2x64xf32>
    %217 = arith.addf %216, %215 : vector<3x2x64xf32>
    %218 = tpu.reciprocal %217 {approx = true} : vector<3x2x64xf32> -> vector<3x2x64xf32>
    %cst_78 = arith.constant 1.000000e+00 : f32
    %219 = vector.broadcast %cst_78 : f32 to vector<3x2x64xf32>
    %220 = arith.minimumf %218, %219 : vector<3x2x64xf32>
    %c0_79 = arith.constant 0 : index
    %c0_80 = arith.constant 0 : index
    %c0_81 = arith.constant 0 : index
    %221 = vector.load %arg5[%c0_79, %c0_80, %c0_81] : memref<3x2x64xf32, #tpu.memory_space<vmem>>, vector<3x2x64xf32>
    tpu.vector_store %arg5[%c0_79, %c0_80, %c0_81], %220 {strides = array<i32>} : memref<3x2x64xf32, #tpu.memory_space<vmem>>, vector<3x2x64xf32>,
    return
  }
}

</mosaic_0001>

<llo_original>
// kernel: tpu_custom_call.1
$region0: #{tpu_custom_call.1}
  #allocation0 [shape = 'u32[]', space=smem, size = 0x4, offset = 0x4, fixed_abs, tag = 'smem constant byte address 0x4 - core index']
  #allocation1 [shape = 'u32[144,128]{1,0:T(1,128)}', space=vmem, size = 0x12000, scoped, tag = 'internal scratch']
  %s0 = inlined_call_operand.vmem [shape: f32[2,256], index: 0, kind: input, shape index: {}]
  %s1 = inlined_call_operand.hbm [shape: bf16[256,128], index: 1, kind: input, shape index: {}]
  %s2 = inlined_call_operand.hbm [shape: bf16[128,256], index: 2, kind: input, shape index: {}]
  %s3 = inlined_call_operand.vmem [shape: f32[2,2,128], index: 3, kind: input, shape index: {}]
  %s4 = inlined_call_operand.vmem [shape: f32[5,3], index: 4, kind: input, shape index: {}]
  %s5 = inlined_call_operand.hbm [shape: f32[3,2,64], index: 5, kind: output, shape index: {}]
  %s6 = sld [smem:[#allocation0]]
  $region42: #{tpu_custom_call.1} parent=0
    _
  %s8 = ssub.s32 1, %s6
  %s9 = scalar_select 0, %s8, %s6
  $region1: #{tpu_custom_call.1} parent=0
    #allocation2 [shape = 'u8[65536]{0}', space=vmem, size = 0x10000, scoped, tag = 'input window, operand 1, single buffered']
    #allocation3 [shape = 's32[1]{0}', space=sflag, size = 0x4, scoped, tag = 'scoped memory for tpu_custom_call.1']
    #allocation4 [shape = 's32[1]{0}', space=sflag, size = 0x4, scoped, tag = 'scoped memory for tpu_custom_call.1']
    #allocation5 [shape = 's32[1]{0}', space=sflag, size = 0x4, scoped, tag = 'scoped memory for tpu_custom_call.1']
    #allocation6 [shape = 'u8[65536]{0}', space=vmem, size = 0x10000, scoped, tag = 'input window, operand 2, single buffered']
    #allocation7 [shape = 's32[1]{0}', space=sflag, size = 0x4, scoped, tag = 'scoped memory for tpu_custom_call.1']
    #allocation8 [shape = 'u8[4096]{0}', space=smem, size = 0x1000, scoped, tag = 'input window, operand 4, single buffered']
    #allocation9 [shape = 'u8[3072]{0}', space=vmem, size = 0xc00, scoped, tag = 'output window, operand 0, single buffered']
    %10 = vsyncpa [#allocation3], 0
    %11 = vsyncpa [#allocation7], 0
    %12 = vsyncpa [#allocation5], 0
    %13 = vsyncpa [#allocation4], 0
    // Predicated region
    $region2: #{tpu_custom_call.1} parent=1 // pred_check
      _
    $region3: #{tpu_custom_call.1} parent=1 // pred_check_branch
      %15 = sbr.rel (0) target = $region5
    $region4: #{tpu_custom_call.1} parent=1 // pred_region
      _
    $region5: #{tpu_custom_call.1} parent=1 // pred_fallthru
      _
    // Predicated region
    $region6: #{tpu_custom_call.1} parent=1 // pred_check
      _
    $region7: #{tpu_custom_call.1} parent=1 // pred_check_branch
      %17 = sbr.rel (0) target = $region9
    $region8: #{tpu_custom_call.1} parent=1 // pred_region
      %s19 = ssub.s32 2048, 2048
      %20 = vsyncadd [#allocation3], %s19
      %s21 = sshll.u32 [#allocation2], 4
      %s22 = int_to_ptr.vmem [resolvable:$true] %s21
      %27 = dma.hbm_to_vmem [thread:$0]  %s1, 2048, %s22, [#allocation3], 64, 64, 4
    $region9: #{tpu_custom_call.1} parent=1 // pred_fallthru
      _
    // Predicated region
    $region10: #{tpu_custom_call.1} parent=1 // pred_check
      _
    $region11: #{tpu_custom_call.1} parent=1 // pred_check_branch
      %29 = sbr.rel (0) target = $region13
    $region12: #{tpu_custom_call.1} parent=1 // pred_region
      %s31 = ssub.s32 2048, 2048
      %32 = vsyncadd [#allocation7], %s31
      %s33 = sshll.u32 [#allocation6], 4
      %s34 = int_to_ptr.vmem [resolvable:$true] %s33
      %39 = dma.hbm_to_vmem [thread:$0]  %s2, 2048, %s34, [#allocation7], 128, 128, 8
    $region13: #{tpu_custom_call.1} parent=1 // pred_fallthru
      _
    // Predicated region
    $region14: #{tpu_custom_call.1} parent=1 // pred_check
      _
    $region15: #{tpu_custom_call.1} parent=1 // pred_check_branch
      %41 = sbr.rel (0) target = $region17
    $region16: #{tpu_custom_call.1} parent=1 // pred_region
      _
    $region17: #{tpu_custom_call.1} parent=1 // pred_fallthru
      _
    // Predicated region
    $region18: #{tpu_custom_call.1} parent=1 // pred_check
      _
    $region19: #{tpu_custom_call.1} parent=1 // pred_check_branch
      %43 = sbr.rel (0) target = $region21
    $region20: #{tpu_custom_call.1} parent=1 // pred_region
      %s45 = ssub.s32 128, 128
      %46 = vsyncadd [#allocation5], %s45
      %s48 = sshll.u32 %s4, 4
      %s49 = int_to_ptr.vmem [resolvable:$true] %s48
      %51 = dma.vmem_to_smem %s49, 128, [#allocation8], [#allocation5]
    $region21: #{tpu_custom_call.1} parent=1 // pred_fallthru
      _
    // Predicated region
    $region22: #{tpu_custom_call.1} parent=1 // pred_check
      _
    $region23: #{tpu_custom_call.1} parent=1 // pred_check_branch
      %53 = sbr.rel (0) target = $region25
    $region24: #{tpu_custom_call.1} parent=1 // pred_region
      %54 = dma.done [#allocation3], 2048
    $region25: #{tpu_custom_call.1} parent=1 // pred_fallthru
      _
    // Predicated region
    $region26: #{tpu_custom_call.1} parent=1 // pred_check
      _
    $region27: #{tpu_custom_call.1} parent=1 // pred_check_branch
      %56 = sbr.rel (0) target = $region29
    $region28: #{tpu_custom_call.1} parent=1 // pred_region
      %57 = dma.done [#allocation7], 2048
    $region29: #{tpu_custom_call.1} parent=1 // pred_fallthru
      _
    // Predicated region
    $region30: #{tpu_custom_call.1} parent=1 // pred_check
      _
    $region31: #{tpu_custom_call.1} parent=1 // pred_check_branch
      %59 = sbr.rel (0) target = $region33
    $region32: #{tpu_custom_call.1} parent=1 // pred_region
      %60 = dma.done [#allocation5], 128
    $region33: #{tpu_custom_call.1} parent=1 // pred_fallthru
      _
    %61 = sfence
    %v63 = vld [vmem:[#allocation2] sm:$0xf]
    %v64 = vld [vmem:[#allocation2 + $0x4] sm:$0xf]
    %v65 = vld [vmem:[#allocation2 + $0x8] sm:$0xf]
    %v66 = vld [vmem:[#allocation2 + $0xc] sm:$0xf]
    %v67 = vld [vmem:[#allocation2 + $0x10] sm:$0xf]
    %v68 = vld [vmem:[#allocation2 + $0x14] sm:$0xf]
    %v69 = vld [vmem:[#allocation2 + $0x18] sm:$0xf]
    %v70 = vld [vmem:[#allocation2 + $0x1c] sm:$0xf]
    %v71 = vld [vmem:[#allocation2 + $0x20] sm:$0xf]
    %v72 = vld [vmem:[#allocation2 + $0x24] sm:$0xf]
    %v73 = vld [vmem:[#allocation2 + $0x28] sm:$0xf]
    %v74 = vld [vmem:[#allocation2 + $0x2c] sm:$0xf]
    %v75 = vld [vmem:[#allocation2 + $0x30] sm:$0xf]
    %v76 = vld [vmem:[#allocation2 + $0x34] sm:$0xf]
    %v77 = vld [vmem:[#allocation2 + $0x38] sm:$0xf]
    %v78 = vld [vmem:[#allocation2 + $0x3c] sm:$0xf]
    %v79 = vld [vmem:[#allocation2 + $0x40] sm:$0xf]
    %v80 = vld [vmem:[#allocation2 + $0x44] sm:$0xf]
    %v81 = vld [vmem:[#allocation2 + $0x48] sm:$0xf]
    %v82 = vld [vmem:[#allocation2 + $0x4c] sm:$0xf]
    %v83 = vld [vmem:[#allocation2 + $0x50] sm:$0xf]
    %v84 = vld [vmem:[#allocation2 + $0x54] sm:$0xf]
    %v85 = vld [vmem:[#allocation2 + $0x58] sm:$0xf]
    %v86 = vld [vmem:[#allocation2 + $0x5c] sm:$0xf]
    %v87 = vld [vmem:[#allocation2 + $0x60] sm:$0xf]
    %v88 = vld [vmem:[#allocation2 + $0x64] sm:$0xf]
    %v89 = vld [vmem:[#allocation2 + $0x68] sm:$0xf]
    %v90 = vld [vmem:[#allocation2 + $0x6c] sm:$0xf]
    %v91 = vld [vmem:[#allocation2 + $0x70] sm:$0xf]
    %v92 = vld [vmem:[#allocation2 + $0x74] sm:$0xf]
    %v93 = vld [vmem:[#allocation2 + $0x78] sm:$0xf]
    %v94 = vld [vmem:[#allocation2 + $0x7c] sm:$0xf]
    %v95 = vld [vmem:[#allocation6] sm:$0xff]
    %v96 = vld [vmem:[#allocation6 + $0x8] sm:$0xff]
    %v97 = vld [vmem:[#allocation6 + $0x10] sm:$0xff]
    %v98 = vld [vmem:[#allocation6 + $0x18] sm:$0xff]
    %v99 = vld [vmem:[#allocation6 + $0x20] sm:$0xff]
    %v100 = vld [vmem:[#allocation6 + $0x28] sm:$0xff]
    %v101 = vld [vmem:[#allocation6 + $0x30] sm:$0xff]
    %v102 = vld [vmem:[#allocation6 + $0x38] sm:$0xff]
    %v103 = vld [vmem:[#allocation6 + $0x40] sm:$0xff]
    %v104 = vld [vmem:[#allocation6 + $0x48] sm:$0xff]
    %v105 = vld [vmem:[#allocation6 + $0x50] sm:$0xff]
    %v106 = vld [vmem:[#allocation6 + $0x58] sm:$0xff]
    %v107 = vld [vmem:[#allocation6 + $0x60] sm:$0xff]
    %v108 = vld [vmem:[#allocation6 + $0x68] sm:$0xff]
    %v109 = vld [vmem:[#allocation6 + $0x70] sm:$0xff]
    %v110 = vld [vmem:[#allocation6 + $0x78] sm:$0xff]
    %v111 = vld [vmem:[%s3] sm:$0x3]
    %s112 = scalar_lea.vmem %s3, 2
    %v113 = vld [vmem:[%s112] sm:$0x3]
    %v114 = vld [vmem:[%s0] sm:$0xf]
    %v117 = vunpack.c.l.s4 1983009808
    %v118 = vunpack.c.0.s8 %v117
    %v119 = vlaneseq
    %v120 = vshrl.u32 %v119, 7
    %v121 = vsub.s32 %v118, %v120
    %v122 = vrot.slane %v114, %v121
    %v123 = vcombine.high %v122, %v122
    %v126 = vpack.c.bf16 %v122, %v122
    %v127 = vpack.c.bf16 %v123, %v123
    %v160 = vunpack.c.l.b16 %v63
    %v161 = vunpack.c.l.b16 %v64
    %v162 = vunpack.c.l.b16 %v65
    %v163 = vunpack.c.l.b16 %v66
    %v164 = vunpack.c.l.b16 %v67
    %v165 = vunpack.c.l.b16 %v68
    %v166 = vunpack.c.l.b16 %v69
    %v167 = vunpack.c.l.b16 %v70
    %v168 = vunpack.c.l.b16 %v71
    %v169 = vunpack.c.l.b16 %v72
    %v170 = vunpack.c.l.b16 %v73
    %v171 = vunpack.c.l.b16 %v74
    %v172 = vunpack.c.l.b16 %v75
    %v173 = vunpack.c.l.b16 %v76
    %v174 = vunpack.c.l.b16 %v77
    %v175 = vunpack.c.l.b16 %v78
    %v176 = vunpack.c.l.b16 %v79
    %v177 = vunpack.c.l.b16 %v80
    %v178 = vunpack.c.l.b16 %v81
    %v179 = vunpack.c.l.b16 %v82
    %v180 = vunpack.c.l.b16 %v83
    %v181 = vunpack.c.l.b16 %v84
    %v182 = vunpack.c.l.b16 %v85
    %v183 = vunpack.c.l.b16 %v86
    %v184 = vunpack.c.l.b16 %v87
    %v185 = vunpack.c.l.b16 %v88
    %v186 = vunpack.c.l.b16 %v89
    %v187 = vunpack.c.l.b16 %v90
    %v188 = vunpack.c.l.b16 %v91
    %v189 = vunpack.c.l.b16 %v92
    %v190 = vunpack.c.l.b16 %v93
    %v191 = vunpack.c.l.b16 %v94
    %v192 = vpack.c.b16 %v161, %v160
    %v193 = vpack.c.b16 %v163, %v162
    %v194 = vpack.c.b16 %v165, %v164
    %v195 = vpack.c.b16 %v167, %v166
    %v196 = vpack.c.b16 %v169, %v168
    %v197 = vpack.c.b16 %v171, %v170
    %v198 = vpack.c.b16 %v173, %v172
    %v199 = vpack.c.b16 %v175, %v174
    %v200 = vpack.c.b16 %v177, %v176
    %v201 = vpack.c.b16 %v179, %v178
    %v202 = vpack.c.b16 %v181, %v180
    %v203 = vpack.c.b16 %v183, %v182
    %v204 = vpack.c.b16 %v185, %v184
    %v205 = vpack.c.b16 %v187, %v186
    %v206 = vpack.c.b16 %v189, %v188
    %v207 = vpack.c.b16 %v191, %v190
    %224 = vmatprep.subr.bf16.mxu0 0
    %225 = vmatpush1.bf16.msra.mxu0 %v192
    %226 = vmatprep.subr.bf16.mxu0 0
    %227 = vmatpush1.bf16.msra.mxu0 %v193
    %228 = vmatprep.subr.bf16.mxu0 0
    %229 = vmatpush1.bf16.msra.mxu0 %v194
    %230 = vmatprep.subr.bf16.mxu0 0
    %231 = vmatpush1.bf16.msra.mxu0 %v195
    %232 = vmatprep.subr.bf16.mxu0 0
    %233 = vmatpush1.bf16.msra.mxu0 %v196
    %234 = vmatprep.subr.bf16.mxu0 0
    %235 = vmatpush1.bf16.msra.mxu0 %v197
    %236 = vmatprep.subr.bf16.mxu0 0
    %237 = vmatpush1.bf16.msra.mxu0 %v198
    %238 = vmatprep.subr.bf16.mxu0 0
    %239 = vmatpush1.bf16.msra.mxu0 %v199
    %240 = vmatprep.subr.bf16.mxu0 0
    %241 = vmatpush1.bf16.msra.mxu0 %v200
    %242 = vmatprep.subr.bf16.mxu0 0
    %243 = vmatpush1.bf16.msra.mxu0 %v201
    %244 = vmatprep.subr.bf16.mxu0 0
    %245 = vmatpush1.bf16.msra.mxu0 %v202
    %246 = vmatprep.subr.bf16.mxu0 0
    %247 = vmatpush1.bf16.msra.mxu0 %v203
    %248 = vmatprep.subr.bf16.mxu0 0
    %249 = vmatpush1.bf16.msra.mxu0 %v204
    %250 = vmatprep.subr.bf16.mxu0 0
    %251 = vmatpush1.bf16.msra.mxu0 %v205
    %252 = vmatprep.subr.bf16.mxu0 0
    %253 = vmatpush1.bf16.msra.mxu0 %v206
    %254 = vmatprep.subr.bf16.mxu0 0
    %255 = vmatpush1.bf16.msra.mxu0 %v207
    %256 = vmatprep.mubr.bf16.mxu0 %v127
    %257 = vmatmul.mubr.bf16.gmra.mrb[0].mxu0 %v126
    %v258 = vpop.f32.mrb[0].mxu0
    %v259 = vadd.f32 0.0, %v258
    %v260 = vpop.f32.mrb[0].mxu0
    %v261 = vpop.f32.mrb[0].mxu0
    %v262 = vpop.f32.mrb[0].mxu0
    %263 = vdwg.mxu0
    %v264 = vadd.f32 %v259, %v111
    %v265 = vtanh.pop %v264
    %v266 = vadd.f32 %v259, %v113
    %v267 = vtanh.pop %v266
    %v268 = vsub.f32 %v267, %v265
    %v269 = vmul.f32 %v268, 15.0
    %v270 = vadd.f32 %v265, %v269
    %v271 = vmul.f32 %v114, 0.9746794
    %v272 = vmul.f32 %v270, -0.05
    %v273 = vpack.c.bf16 %v272, %v272
    %v290 = vunpack.c.l.b16 %v95
    %v291 = vunpack.c.h.b16 %v95
    %v292 = vunpack.c.l.b16 %v96
    %v293 = vunpack.c.h.b16 %v96
    %v294 = vunpack.c.l.b16 %v97
    %v295 = vunpack.c.h.b16 %v97
    %v296 = vunpack.c.l.b16 %v98
    %v297 = vunpack.c.h.b16 %v98
    %v298 = vunpack.c.l.b16 %v99
    %v299 = vunpack.c.h.b16 %v99
    %v300 = vunpack.c.l.b16 %v100
    %v301 = vunpack.c.h.b16 %v100
    %v302 = vunpack.c.l.b16 %v101
    %v303 = vunpack.c.h.b16 %v101
    %v304 = vunpack.c.l.b16 %v102
    %v305 = vunpack.c.h.b16 %v102
    %v306 = vunpack.c.l.b16 %v103
    %v307 = vunpack.c.h.b16 %v103
    %v308 = vunpack.c.l.b16 %v104
    %v309 = vunpack.c.h.b16 %v104
    %v310 = vunpack.c.l.b16 %v105
    %v311 = vunpack.c.h.b16 %v105
    %v312 = vunpack.c.l.b16 %v106
    %v313 = vunpack.c.h.b16 %v106
    %v314 = vunpack.c.l.b16 %v107
    %v315 = vunpack.c.h.b16 %v107
    %v316 = vunpack.c.l.b16 %v108
    %v317 = vunpack.c.h.b16 %v108
    %v318 = vunpack.c.l.b16 %v109
    %v319 = vunpack.c.h.b16 %v109
    %v320 = vunpack.c.l.b16 %v110
    %v321 = vunpack.c.h.b16 %v110
    %v322 = vpack.c.b16 %v292, %v290
    %v323 = vpack.c.b16 %v293, %v291
    %v324 = vpack.c.b16 %v296, %v294
    %v325 = vpack.c.b16 %v297, %v295
    %v326 = vpack.c.b16 %v300, %v298
    %v327 = vpack.c.b16 %v301, %v299
    %v328 = vpack.c.b16 %v304, %v302
    %v329 = vpack.c.b16 %v305, %v303
    %v330 = vpack.c.b16 %v308, %v306
    %v331 = vpack.c.b16 %v309, %v307
    %v332 = vpack.c.b16 %v312, %v310
    %v333 = vpack.c.b16 %v313, %v311
    %v334 = vpack.c.b16 %v316, %v314
    %v335 = vpack.c.b16 %v317, %v315
    %v336 = vpack.c.b16 %v320, %v318
    %v337 = vpack.c.b16 %v321, %v319
    %354 = vmatprep.subr.bf16.mxu0 %v323
    %355 = vmatpush1.bf16.msra.mxu0 %v322
    %356 = vmatprep.subr.bf16.mxu0 %v325
    %357 = vmatpush1.bf16.msra.mxu0 %v324
    %358 = vmatprep.subr.bf16.mxu0 %v327
    %359 = vmatpush1.bf16.msra.mxu0 %v326
    %360 = vmatprep.subr.bf16.mxu0 %v329
    %361 = vmatpush1.bf16.msra.mxu0 %v328
    %362 = vmatprep.subr.bf16.mxu0 %v331
    %363 = vmatpush1.bf16.msra.mxu0 %v330
    %364 = vmatprep.subr.bf16.mxu0 %v333
    %365 = vmatpush1.bf16.msra.mxu0 %v332
    %366 = vmatprep.subr.bf16.mxu0 %v335
    %367 = vmatpush1.bf16.msra.mxu0 %v334
    %368 = vmatprep.subr.bf16.mxu0 %v337
    %369 = vmatpush1.bf16.msra.mxu0 %v336
    %370 = vmatprep.subr.bf16.mxu0 0
    %371 = vmatpush1.bf16.msra.mxu0 0
    %372 = vmatprep.subr.bf16.mxu0 0
    %373 = vmatpush1.bf16.msra.mxu0 0
    %374 = vmatprep.subr.bf16.mxu0 0
    %375 = vmatpush1.bf16.msra.mxu0 0
    %376 = vmatprep.subr.bf16.mxu0 0
    %377 = vmatpush1.bf16.msra.mxu0 0
    %378 = vmatprep.subr.bf16.mxu0 0
    %379 = vmatpush1.bf16.msra.mxu0 0
    %380 = vmatprep.subr.bf16.mxu0 0
    %381 = vmatpush1.bf16.msra.mxu0 0
    %382 = vmatprep.subr.bf16.mxu0 0
    %383 = vmatpush1.bf16.msra.mxu0 0
    %384 = vmatprep.subr.bf16.mxu0 0
    %385 = vmatpush1.bf16.msra.mxu0 0
    %386 = vmatprep.mubr.bf16.mxu0 0
    %387 = vmatmul.mubr.bf16.gmra.mrb[0].mxu0 %v273
    %v388 = vpop.f32.mrb[0].mxu0
    %v389 = vadd.f32 0.0, %v388
    %v390 = vpop.f32.mrb[0].mxu0
    %v391 = vadd.f32 0.0, %v390
    %v392 = vpop.f32.mrb[0].mxu0
    %v393 = vpop.f32.mrb[0].mxu0
    %394 = vdwg.mxu0
    %v397 = vcombine.low %v389, %v391
    %v399 = vunpack.c.l.s4 1983009808
    %v400 = vunpack.c.0.s8 %v399
    %v401 = vlaneseq
    %v402 = vshrl.u32 %v401, 7
    %v403 = vsub.s32 %v400, %v402
    %v404 = vrot.slane %v397, %v403
    %v406 = vadd.f32 %v271, %v404
    %v409 = vunpack.c.l.s4 1983009808
    %v410 = vunpack.c.0.s8 %v409
    %v411 = vlaneseq
    %v412 = vshrl.u32 %v411, 7
    %v413 = vsub.s32 %v410, %v412
    %v414 = vrot.slane %v406, %v413
    %v415 = vcombine.high %v414, %v414
    %v418 = vpack.c.bf16 %v414, %v414
    %v419 = vpack.c.bf16 %v415, %v415
    %420 = vmatprep.subr.bf16.mxu0 0
    %421 = vmatpush1.bf16.msra.mxu0 %v192
    %422 = vmatprep.subr.bf16.mxu0 0
    %423 = vmatpush1.bf16.msra.mxu0 %v193
    %424 = vmatprep.subr.bf16.mxu0 0
    %425 = vmatpush1.bf16.msra.mxu0 %v194
    %426 = vmatprep.subr.bf16.mxu0 0
    %427 = vmatpush1.bf16.msra.mxu0 %v195
    %428 = vmatprep.subr.bf16.mxu0 0
    %429 = vmatpush1.bf16.msra.mxu0 %v196
    %430 = vmatprep.subr.bf16.mxu0 0
    %431 = vmatpush1.bf16.msra.mxu0 %v197
    %432 = vmatprep.subr.bf16.mxu0 0
    %433 = vmatpush1.bf16.msra.mxu0 %v198
    %434 = vmatprep.subr.bf16.mxu0 0
    %435 = vmatpush1.bf16.msra.mxu0 %v199
    %436 = vmatprep.subr.bf16.mxu0 0
    %437 = vmatpush1.bf16.msra.mxu0 %v200
    %438 = vmatprep.subr.bf16.mxu0 0
    %439 = vmatpush1.bf16.msra.mxu0 %v201
    %440 = vmatprep.subr.bf16.mxu0 0
    %441 = vmatpush1.bf16.msra.mxu0 %v202
    %442 = vmatprep.subr.bf16.mxu0 0
    %443 = vmatpush1.bf16.msra.mxu0 %v203
    %444 = vmatprep.subr.bf16.mxu0 0
    %445 = vmatpush1.bf16.msra.mxu0 %v204
    %446 = vmatprep.subr.bf16.mxu0 0
    %447 = vmatpush1.bf16.msra.mxu0 %v205
    %448 = vmatprep.subr.bf16.mxu0 0
    %449 = vmatpush1.bf16.msra.mxu0 %v206
    %450 = vmatprep.subr.bf16.mxu0 0
    %451 = vmatpush1.bf16.msra.mxu0 %v207
    %452 = vmatprep.mubr.bf16.mxu0 %v419
    %453 = vmatmul.mubr.bf16.gmra.mrb[0].mxu0 %v418
    %v454 = vpop.f32.mrb[0].mxu0
    %v455 = vadd.f32 0.0, %v454
    %v456 = vpop.f32.mrb[0].mxu0
    %v457 = vpop.f32.mrb[0].mxu0
    %v458 = vpop.f32.mrb[0].mxu0
    %459 = vdwg.mxu0
    %v460 = vadd.f32 %v455, %v111
    %v461 = vtanh.pop %v460
    %v462 = vadd.f32 %v455, %v113
    %v463 = vtanh.pop %v462
    %v464 = vsub.f32 %v463, %v461
    %v465 = vmul.f32 %v464, 15.0
    %v466 = vadd.f32 %v461, %v465
    %v467 = vmul.f32 %v406, 0.9486833
    %v468 = vmul.f32 %v466, -0.1
    %v469 = vpack.c.bf16 %v468, %v468
    %470 = vmatprep.subr.bf16.mxu0 %v323
    %471 = vmatpush1.bf16.msra.mxu0 %v322
    %472 = vmatprep.subr.bf16.mxu0 %v325
    %473 = vmatpush1.bf16.msra.mxu0 %v324
    %474 = vmatprep.subr.bf16.mxu0 %v327
    %475 = vmatpush1.bf16.msra.mxu0 %v326
    %476 = vmatprep.subr.bf16.mxu0 %v329
    %477 = vmatpush1.bf16.msra.mxu0 %v328
    %478 = vmatprep.subr.bf16.mxu0 %v331
    %479 = vmatpush1.bf16.msra.mxu0 %v330
    %480 = vmatprep.subr.bf16.mxu0 %v333
    %481 = vmatpush1.bf16.msra.mxu0 %v332
    %482 = vmatprep.subr.bf16.mxu0 %v335
    %483 = vmatpush1.bf16.msra.mxu0 %v334
    %484 = vmatprep.subr.bf16.mxu0 %v337
    %485 = vmatpush1.bf16.msra.mxu0 %v336
    %486 = vmatprep.subr.bf16.mxu0 0
    %487 = vmatpush1.bf16.msra.mxu0 0
    %488 = vmatprep.subr.bf16.mxu0 0
    %489 = vmatpush1.bf16.msra.mxu0 0
    %490 = vmatprep.subr.bf16.mxu0 0
    %491 = vmatpush1.bf16.msra.mxu0 0
    %492 = vmatprep.subr.bf16.mxu0 0
    %493 = vmatpush1.bf16.msra.mxu0 0
    %494 = vmatprep.subr.bf16.mxu0 0
    %495 = vmatpush1.bf16.msra.mxu0 0
    %496 = vmatprep.subr.bf16.mxu0 0
    %497 = vmatpush1.bf16.msra.mxu0 0
    %498 = vmatprep.subr.bf16.mxu0 0
    %499 = vmatpush1.bf16.msra.mxu0 0
    %500 = vmatprep.subr.bf16.mxu0 0
    %501 = vmatpush1.bf16.msra.mxu0 0
    %502 = vmatprep.mubr.bf16.mxu0 0
    %503 = vmatmul.mubr.bf16.gmra.mrb[0].mxu0 %v469
    %v504 = vpop.f32.mrb[0].mxu0
    %v505 = vadd.f32 0.0, %v504
    %v506 = vpop.f32.mrb[0].mxu0
    %v507 = vadd.f32 0.0, %v506
    %v508 = vpop.f32.mrb[0].mxu0
    %v509 = vpop.f32.mrb[0].mxu0
    %510 = vdwg.mxu0
    %v513 = vcombine.low %v505, %v507
    %v515 = vunpack.c.l.s4 1983009808
    %v516 = vunpack.c.0.s8 %v515
    %v517 = vlaneseq
    %v518 = vshrl.u32 %v517, 7
    %v519 = vsub.s32 %v516, %v518
    %v520 = vrot.slane %v513, %v519
    %v522 = vadd.f32 %v467, %v520
    %v525 = vunpack.c.l.s4 1983009808
    %v526 = vunpack.c.0.s8 %v525
    %v527 = vlaneseq
    %v528 = vshrl.u32 %v527, 7
    %v529 = vsub.s32 %v526, %v528
    %v530 = vrot.slane %v522, %v529
    %v531 = vcombine.high %v530, %v530
    %v534 = vpack.c.bf16 %v530, %v530
    %v535 = vpack.c.bf16 %v531, %v531
    %536 = vmatprep.subr.bf16.mxu0 0
    %537 = vmatpush1.bf16.msra.mxu0 %v192
    %538 = vmatprep.subr.bf16.mxu0 0
    %539 = vmatpush1.bf16.msra.mxu0 %v193
    %540 = vmatprep.subr.bf16.mxu0 0
    %541 = vmatpush1.bf16.msra.mxu0 %v194
    %542 = vmatprep.subr.bf16.mxu0 0
    %543 = vmatpush1.bf16.msra.mxu0 %v195
    %544 = vmatprep.subr.bf16.mxu0 0
    %545 = vmatpush1.bf16.msra.mxu0 %v196
    %546 = vmatprep.subr.bf16.mxu0 0
    %547 = vmatpush1.bf16.msra.mxu0 %v197
    %548 = vmatprep.subr.bf16.mxu0 0
    %549 = vmatpush1.bf16.msra.mxu0 %v198
    %550 = vmatprep.subr.bf16.mxu0 0
    %551 = vmatpush1.bf16.msra.mxu0 %v199
    %552 = vmatprep.subr.bf16.mxu0 0
    %553 = vmatpush1.bf16.msra.mxu0 %v200
    %554 = vmatprep.subr.bf16.mxu0 0
    %555 = vmatpush1.bf16.msra.mxu0 %v201
    %556 = vmatprep.subr.bf16.mxu0 0
    %557 = vmatpush1.bf16.msra.mxu0 %v202
    %558 = vmatprep.subr.bf16.mxu0 0
    %559 = vmatpush1.bf16.msra.mxu0 %v203
    %560 = vmatprep.subr.bf16.mxu0 0
    %561 = vmatpush1.bf16.msra.mxu0 %v204
    %562 = vmatprep.subr.bf16.mxu0 0
    %563 = vmatpush1.bf16.msra.mxu0 %v205
    %564 = vmatprep.subr.bf16.mxu0 0
    %565 = vmatpush1.bf16.msra.mxu0 %v206
    %566 = vmatprep.subr.bf16.mxu0 0
    %567 = vmatpush1.bf16.msra.mxu0 %v207
    %568 = vmatprep.mubr.bf16.mxu0 %v535
    %569 = vmatmul.mubr.bf16.gmra.mrb[0].mxu0 %v534
    %v570 = vpop.f32.mrb[0].mxu0
    %v571 = vadd.f32 0.0, %v570
    %v572 = vpop.f32.mrb[0].mxu0
    %v573 = vpop.f32.mrb[0].mxu0
    %v574 = vpop.f32.mrb[0].mxu0
    %575 = vdwg.mxu0
    %v576 = vadd.f32 %v571, %v111
    %v577 = vtanh.pop %v576
    %v578 = vadd.f32 %v571, %v113
    %v579 = vtanh.pop %v578
    %v580 = vsub.f32 %v579, %v577
    %v581 = vmul.f32 %v580, 15.0
    %v582 = vadd.f32 %v577, %v581
    %v583 = vmul.f32 %v522, 0.92195445
    %v584 = vmul.f32 %v582, -0.15
    %v585 = vpack.c.bf16 %v584, %v584
    %586 = vmatprep.subr.bf16.mxu0 %v323
    %587 = vmatpush1.bf16.msra.mxu0 %v322
    %588 = vmatprep.subr.bf16.mxu0 %v325
    %589 = vmatpush1.bf16.msra.mxu0 %v324
    %590 = vmatprep.subr.bf16.mxu0 %v327
    %591 = vmatpush1.bf16.msra.mxu0 %v326
    %592 = vmatprep.subr.bf16.mxu0 %v329
    %593 = vmatpush1.bf16.msra.mxu0 %v328
    %594 = vmatprep.subr.bf16.mxu0 %v331
    %595 = vmatpush1.bf16.msra.mxu0 %v330
    %596 = vmatprep.subr.bf16.mxu0 %v333
    %597 = vmatpush1.bf16.msra.mxu0 %v332
    %598 = vmatprep.subr.bf16.mxu0 %v335
    %599 = vmatpush1.bf16.msra.mxu0 %v334
    %600 = vmatprep.subr.bf16.mxu0 %v337
    %601 = vmatpush1.bf16.msra.mxu0 %v336
    %602 = vmatprep.subr.bf16.mxu0 0
    %603 = vmatpush1.bf16.msra.mxu0 0
    %604 = vmatprep.subr.bf16.mxu0 0
    %605 = vmatpush1.bf16.msra.mxu0 0
    %606 = vmatprep.subr.bf16.mxu0 0
    %607 = vmatpush1.bf16.msra.mxu0 0
    %608 = vmatprep.subr.bf16.mxu0 0
    %609 = vmatpush1.bf16.msra.mxu0 0
    %610 = vmatprep.subr.bf16.mxu0 0
    %611 = vmatpush1.bf16.msra.mxu0 0
    %612 = vmatprep.subr.bf16.mxu0 0
    %613 = vmatpush1.bf16.msra.mxu0 0
    %614 = vmatprep.subr.bf16.mxu0 0
    %615 = vmatpush1.bf16.msra.mxu0 0
    %616 = vmatprep.subr.bf16.mxu0 0
    %617 = vmatpush1.bf16.msra.mxu0 0
    %618 = vmatprep.mubr.bf16.mxu0 0
    %619 = vmatmul.mubr.bf16.gmra.mrb[0].mxu0 %v585
    %v620 = vpop.f32.mrb[0].mxu0
    %v621 = vadd.f32 0.0, %v620
    %v622 = vpop.f32.mrb[0].mxu0
    %v623 = vadd.f32 0.0, %v622
    %v624 = vpop.f32.mrb[0].mxu0
    %v625 = vpop.f32.mrb[0].mxu0
    %626 = vdwg.mxu0
    %v629 = vcombine.low %v621, %v623
    %v631 = vunpack.c.l.s4 1983009808
    %v632 = vunpack.c.0.s8 %v631
    %v633 = vlaneseq
    %v634 = vshrl.u32 %v633, 7
    %v635 = vsub.s32 %v632, %v634
    %v636 = vrot.slane %v629, %v635
    %v638 = vadd.f32 %v583, %v636
    %v641 = vunpack.c.l.s4 1983009808
    %v642 = vunpack.c.0.s8 %v641
    %v643 = vlaneseq
    %v644 = vshrl.u32 %v643, 7
    %v645 = vsub.s32 %v642, %v644
    %v646 = vrot.slane %v638, %v645
    %v647 = vcombine.high %v646, %v646
    %v650 = vpack.c.bf16 %v646, %v646
    %v651 = vpack.c.bf16 %v647, %v647
    %652 = vmatprep.subr.bf16.mxu0 0
    %653 = vmatpush1.bf16.msra.mxu0 %v192
    %654 = vmatprep.subr.bf16.mxu0 0
    %655 = vmatpush1.bf16.msra.mxu0 %v193
    %656 = vmatprep.subr.bf16.mxu0 0
    %657 = vmatpush1.bf16.msra.mxu0 %v194
    %658 = vmatprep.subr.bf16.mxu0 0
    %659 = vmatpush1.bf16.msra.mxu0 %v195
    %660 = vmatprep.subr.bf16.mxu0 0
    %661 = vmatpush1.bf16.msra.mxu0 %v196
    %662 = vmatprep.subr.bf16.mxu0 0
    %663 = vmatpush1.bf16.msra.mxu0 %v197
    %664 = vmatprep.subr.bf16.mxu0 0
    %665 = vmatpush1.bf16.msra.mxu0 %v198
    %666 = vmatprep.subr.bf16.mxu0 0
    %667 = vmatpush1.bf16.msra.mxu0 %v199
    %668 = vmatprep.subr.bf16.mxu0 0
    %669 = vmatpush1.bf16.msra.mxu0 %v200
    %670 = vmatprep.subr.bf16.mxu0 0
    %671 = vmatpush1.bf16.msra.mxu0 %v201
    %672 = vmatprep.subr.bf16.mxu0 0
    %673 = vmatpush1.bf16.msra.mxu0 %v202
    %674 = vmatprep.subr.bf16.mxu0 0
    %675 = vmatpush1.bf16.msra.mxu0 %v203
    %676 = vmatprep.subr.bf16.mxu0 0
    %677 = vmatpush1.bf16.msra.mxu0 %v204
    %678 = vmatprep.subr.bf16.mxu0 0
    %679 = vmatpush1.bf16.msra.mxu0 %v205
    %680 = vmatprep.subr.bf16.mxu0 0
    %681 = vmatpush1.bf16.msra.mxu0 %v206
    %682 = vmatprep.subr.bf16.mxu0 0
    %683 = vmatpush1.bf16.msra.mxu0 %v207
    %684 = vmatprep.mubr.bf16.mxu0 %v651
    %685 = vmatmul.mubr.bf16.gmra.mrb[0].mxu0 %v650
    %v686 = vpop.f32.mrb[0].mxu0
    %v687 = vadd.f32 0.0, %v686
    %v688 = vpop.f32.mrb[0].mxu0
    %v689 = vpop.f32.mrb[0].mxu0
    %v690 = vpop.f32.mrb[0].mxu0
    %691 = vdwg.mxu0
    %v692 = vadd.f32 %v687, %v111
    %v693 = vtanh.pop %v692
    %v694 = vadd.f32 %v687, %v113
    %v695 = vtanh.pop %v694
    %v696 = vsub.f32 %v695, %v693
    %v697 = vmul.f32 %v696, 15.0
    %v698 = vadd.f32 %v693, %v697
    %v699 = vmul.f32 %v638, 0.8944272
    %v700 = vmul.f32 %v698, -0.2
    %v701 = vpack.c.bf16 %v700, %v700
    %702 = vmatprep.subr.bf16.mxu0 %v323
    %703 = vmatpush1.bf16.msra.mxu0 %v322
    %704 = vmatprep.subr.bf16.mxu0 %v325
    %705 = vmatpush1.bf16.msra.mxu0 %v324
    %706 = vmatprep.subr.bf16.mxu0 %v327
    %707 = vmatpush1.bf16.msra.mxu0 %v326
    %708 = vmatprep.subr.bf16.mxu0 %v329
    %709 = vmatpush1.bf16.msra.mxu0 %v328
    %710 = vmatprep.subr.bf16.mxu0 %v331
    %711 = vmatpush1.bf16.msra.mxu0 %v330
    %712 = vmatprep.subr.bf16.mxu0 %v333
    %713 = vmatpush1.bf16.msra.mxu0 %v332
    %714 = vmatprep.subr.bf16.mxu0 %v335
    %715 = vmatpush1.bf16.msra.mxu0 %v334
    %716 = vmatprep.subr.bf16.mxu0 %v337
    %717 = vmatpush1.bf16.msra.mxu0 %v336
    %718 = vmatprep.subr.bf16.mxu0 0
    %719 = vmatpush1.bf16.msra.mxu0 0
    %720 = vmatprep.subr.bf16.mxu0 0
    %721 = vmatpush1.bf16.msra.mxu0 0
    %722 = vmatprep.subr.bf16.mxu0 0
    %723 = vmatpush1.bf16.msra.mxu0 0
    %724 = vmatprep.subr.bf16.mxu0 0
    %725 = vmatpush1.bf16.msra.mxu0 0
    %726 = vmatprep.subr.bf16.mxu0 0
    %727 = vmatpush1.bf16.msra.mxu0 0
    %728 = vmatprep.subr.bf16.mxu0 0
    %729 = vmatpush1.bf16.msra.mxu0 0
    %730 = vmatprep.subr.bf16.mxu0 0
    %731 = vmatpush1.bf16.msra.mxu0 0
    %732 = vmatprep.subr.bf16.mxu0 0
    %733 = vmatpush1.bf16.msra.mxu0 0
    %734 = vmatprep.mubr.bf16.mxu0 0
    %735 = vmatmul.mubr.bf16.gmra.mrb[0].mxu0 %v701
    %v736 = vpop.f32.mrb[0].mxu0
    %v737 = vadd.f32 0.0, %v736
    %v738 = vpop.f32.mrb[0].mxu0
    %v739 = vadd.f32 0.0, %v738
    %v740 = vpop.f32.mrb[0].mxu0
    %v741 = vpop.f32.mrb[0].mxu0
    %742 = vdwg.mxu0
    %v745 = vcombine.low %v737, %v739
    %v747 = vunpack.c.l.s4 1983009808
    %v748 = vunpack.c.0.s8 %v747
    %v749 = vlaneseq
    %v750 = vshrl.u32 %v749, 7
    %v751 = vsub.s32 %v748, %v750
    %v752 = vrot.slane %v745, %v751
    %v754 = vadd.f32 %v699, %v752
    %v757 = vunpack.c.l.s4 1983009808
    %v758 = vunpack.c.0.s8 %v757
    %v759 = vlaneseq
    %v760 = vshrl.u32 %v759, 7
    %v761 = vsub.s32 %v758, %v760
    %v762 = vrot.slane %v754, %v761
    %v763 = vcombine.high %v762, %v762
    %v766 = vpack.c.bf16 %v762, %v762
    %v767 = vpack.c.bf16 %v763, %v763
    %768 = vmatprep.subr.bf16.mxu0 0
    %769 = vmatpush1.bf16.msra.mxu0 %v192
    %770 = vmatprep.subr.bf16.mxu0 0
    %771 = vmatpush1.bf16.msra.mxu0 %v193
    %772 = vmatprep.subr.bf16.mxu0 0
    %773 = vmatpush1.bf16.msra.mxu0 %v194
    %774 = vmatprep.subr.bf16.mxu0 0
    %775 = vmatpush1.bf16.msra.mxu0 %v195
    %776 = vmatprep.subr.bf16.mxu0 0
    %777 = vmatpush1.bf16.msra.mxu0 %v196
    %778 = vmatprep.subr.bf16.mxu0 0
    %779 = vmatpush1.bf16.msra.mxu0 %v197
    %780 = vmatprep.subr.bf16.mxu0 0
    %781 = vmatpush1.bf16.msra.mxu0 %v198
    %782 = vmatprep.subr.bf16.mxu0 0
    %783 = vmatpush1.bf16.msra.mxu0 %v199
    %784 = vmatprep.subr.bf16.mxu0 0
    %785 = vmatpush1.bf16.msra.mxu0 %v200
    %786 = vmatprep.subr.bf16.mxu0 0
    %787 = vmatpush1.bf16.msra.mxu0 %v201
    %788 = vmatprep.subr.bf16.mxu0 0
    %789 = vmatpush1.bf16.msra.mxu0 %v202
    %790 = vmatprep.subr.bf16.mxu0 0
    %791 = vmatpush1.bf16.msra.mxu0 %v203
    %792 = vmatprep.subr.bf16.mxu0 0
    %793 = vmatpush1.bf16.msra.mxu0 %v204
    %794 = vmatprep.subr.bf16.mxu0 0
    %795 = vmatpush1.bf16.msra.mxu0 %v205
    %796 = vmatprep.subr.bf16.mxu0 0
    %797 = vmatpush1.bf16.msra.mxu0 %v206
    %798 = vmatprep.subr.bf16.mxu0 0
    %799 = vmatpush1.bf16.msra.mxu0 %v207
    %800 = vmatprep.mubr.bf16.mxu0 %v767
    %801 = vmatmul.mubr.bf16.gmra.mrb[0].mxu0 %v766
    %v802 = vpop.f32.mrb[0].mxu0
    %v803 = vadd.f32 0.0, %v802
    %v804 = vpop.f32.mrb[0].mxu0
    %v805 = vpop.f32.mrb[0].mxu0
    %v806 = vpop.f32.mrb[0].mxu0
    %807 = vdwg.mxu0
    %v808 = vadd.f32 %v803, %v111
    %v809 = vtanh.pop %v808
    %v810 = vadd.f32 %v803, %v113
    %v811 = vtanh.pop %v810
    %v812 = vsub.f32 %v811, %v809
    %v813 = vmul.f32 %v812, 15.0
    %v814 = vadd.f32 %v809, %v813
    %v815 = vmul.f32 %v754, 0.8660254
    %v816 = vmul.f32 %v814, -0.25
    %v817 = vpack.c.bf16 %v816, %v816
    %818 = vmatprep.subr.bf16.mxu0 %v323
    %819 = vmatpush1.bf16.msra.mxu0 %v322
    %820 = vmatprep.subr.bf16.mxu0 %v325
    %821 = vmatpush1.bf16.msra.mxu0 %v324
    %822 = vmatprep.subr.bf16.mxu0 %v327
    %823 = vmatpush1.bf16.msra.mxu0 %v326
    %824 = vmatprep.subr.bf16.mxu0 %v329
    %825 = vmatpush1.bf16.msra.mxu0 %v328
    %826 = vmatprep.subr.bf16.mxu0 %v331
    %827 = vmatpush1.bf16.msra.mxu0 %v330
    %828 = vmatprep.subr.bf16.mxu0 %v333
    %829 = vmatpush1.bf16.msra.mxu0 %v332
    %830 = vmatprep.subr.bf16.mxu0 %v335
    %831 = vmatpush1.bf16.msra.mxu0 %v334
    %832 = vmatprep.subr.bf16.mxu0 %v337
    %833 = vmatpush1.bf16.msra.mxu0 %v336
    %834 = vmatprep.subr.bf16.mxu0 0
    %835 = vmatpush1.bf16.msra.mxu0 0
    %836 = vmatprep.subr.bf16.mxu0 0
    %837 = vmatpush1.bf16.msra.mxu0 0
    %838 = vmatprep.subr.bf16.mxu0 0
    %839 = vmatpush1.bf16.msra.mxu0 0
    %840 = vmatprep.subr.bf16.mxu0 0
    %841 = vmatpush1.bf16.msra.mxu0 0
    %842 = vmatprep.subr.bf16.mxu0 0
    %843 = vmatpush1.bf16.msra.mxu0 0
    %844 = vmatprep.subr.bf16.mxu0 0
    %845 = vmatpush1.bf16.msra.mxu0 0
    %846 = vmatprep.subr.bf16.mxu0 0
    %847 = vmatpush1.bf16.msra.mxu0 0
    %848 = vmatprep.subr.bf16.mxu0 0
    %849 = vmatpush1.bf16.msra.mxu0 0
    %850 = vmatprep.mubr.bf16.mxu0 0
    %851 = vmatmul.mubr.bf16.gmra.mrb[0].mxu0 %v817
    %v852 = vpop.f32.mrb[0].mxu0
    %v853 = vadd.f32 0.0, %v852
    %v854 = vpop.f32.mrb[0].mxu0
    %v855 = vadd.f32 0.0, %v854
    %v856 = vpop.f32.mrb[0].mxu0
    %v857 = vpop.f32.mrb[0].mxu0
    %858 = vdwg.mxu0
    %v861 = vcombine.low %v853, %v855
    %v863 = vunpack.c.l.s4 1983009808
    %v864 = vunpack.c.0.s8 %v863
    %v865 = vlaneseq
    %v866 = vshrl.u32 %v865, 7
    %v867 = vsub.s32 %v864, %v866
    %v868 = vrot.slane %v861, %v867
    %v870 = vadd.f32 %v815, %v868
    %v873 = vunpack.c.l.s4 1983009808
    %v874 = vunpack.c.0.s8 %v873
    %v875 = vlaneseq
    %v876 = vshrl.u32 %v875, 7
    %v877 = vsub.s32 %v874, %v876
    %v878 = vrot.slane %v870, %v877
    %v879 = vcombine.high %v878, %v878
    %v882 = vpack.c.bf16 %v878, %v878
    %v883 = vpack.c.bf16 %v879, %v879
    %884 = vmatprep.subr.bf16.mxu0 0
    %885 = vmatpush1.bf16.msra.mxu0 %v192
    %886 = vmatprep.subr.bf16.mxu0 0
    %887 = vmatpush1.bf16.msra.mxu0 %v193
    %888 = vmatprep.subr.bf16.mxu0 0
    %889 = vmatpush1.bf16.msra.mxu0 %v194
    %890 = vmatprep.subr.bf16.mxu0 0
    %891 = vmatpush1.bf16.msra.mxu0 %v195
    %892 = vmatprep.subr.bf16.mxu0 0
    %893 = vmatpush1.bf16.msra.mxu0 %v196
    %894 = vmatprep.subr.bf16.mxu0 0
    %895 = vmatpush1.bf16.msra.mxu0 %v197
    %896 = vmatprep.subr.bf16.mxu0 0
    %897 = vmatpush1.bf16.msra.mxu0 %v198
    %898 = vmatprep.subr.bf16.mxu0 0
    %899 = vmatpush1.bf16.msra.mxu0 %v199
    %900 = vmatprep.subr.bf16.mxu0 0
    %901 = vmatpush1.bf16.msra.mxu0 %v200
    %902 = vmatprep.subr.bf16.mxu0 0
    %903 = vmatpush1.bf16.msra.mxu0 %v201
    %904 = vmatprep.subr.bf16.mxu0 0
    %905 = vmatpush1.bf16.msra.mxu0 %v202
    %906 = vmatprep.subr.bf16.mxu0 0
    %907 = vmatpush1.bf16.msra.mxu0 %v203
    %908 = vmatprep.subr.bf16.mxu0 0
    %909 = vmatpush1.bf16.msra.mxu0 %v204
    %910 = vmatprep.subr.bf16.mxu0 0
    %911 = vmatpush1.bf16.msra.mxu0 %v205
    %912 = vmatprep.subr.bf16.mxu0 0
    %913 = vmatpush1.bf16.msra.mxu0 %v206
    %914 = vmatprep.subr.bf16.mxu0 0
    %915 = vmatpush1.bf16.msra.mxu0 %v207
    %916 = vmatprep.mubr.bf16.mxu0 %v883
    %917 = vmatmul.mubr.bf16.gmra.mrb[0].mxu0 %v882
    %v918 = vpop.f32.mrb[0].mxu0
    %v919 = vadd.f32 0.0, %v918
    %v920 = vpop.f32.mrb[0].mxu0
    %v921 = vpop.f32.mrb[0].mxu0
    %v922 = vpop.f32.mrb[0].mxu0
    %923 = vdwg.mxu0
    %v924 = vadd.f32 %v919, %v111
    %v925 = vtanh.pop %v924
    %v926 = vadd.f32 %v919, %v113
    %v927 = vtanh.pop %v926
    %v928 = vsub.f32 %v927, %v925
    %v929 = vmul.f32 %v928, 15.0
    %v930 = vadd.f32 %v925, %v929
    %v931 = vmul.f32 %v870, 0.83666
    %v932 = vmul.f32 %v930, -0.3
    %v933 = vpack.c.bf16 %v932, %v932
    %934 = vmatprep.subr.bf16.mxu0 %v323
    %935 = vmatpush1.bf16.msra.mxu0 %v322
    %936 = vmatprep.subr.bf16.mxu0 %v325
    %937 = vmatpush1.bf16.msra.mxu0 %v324
    %938 = vmatprep.subr.bf16.mxu0 %v327
    %939 = vmatpush1.bf16.msra.mxu0 %v326
    %940 = vmatprep.subr.bf16.mxu0 %v329
    %941 = vmatpush1.bf16.msra.mxu0 %v328
    %942 = vmatprep.subr.bf16.mxu0 %v331
    %943 = vmatpush1.bf16.msra.mxu0 %v330
    %944 = vmatprep.subr.bf16.mxu0 %v333
    %945 = vmatpush1.bf16.msra.mxu0 %v332
    %946 = vmatprep.subr.bf16.mxu0 %v335
    %947 = vmatpush1.bf16.msra.mxu0 %v334
    %948 = vmatprep.subr.bf16.mxu0 %v337
    %949 = vmatpush1.bf16.msra.mxu0 %v336
    %950 = vmatprep.subr.bf16.mxu0 0
    %951 = vmatpush1.bf16.msra.mxu0 0
    %952 = vmatprep.subr.bf16.mxu0 0
    %953 = vmatpush1.bf16.msra.mxu0 0
    %954 = vmatprep.subr.bf16.mxu0 0
    %955 = vmatpush1.bf16.msra.mxu0 0
    %956 = vmatprep.subr.bf16.mxu0 0
    %957 = vmatpush1.bf16.msra.mxu0 0
    %958 = vmatprep.subr.bf16.mxu0 0
    %959 = vmatpush1.bf16.msra.mxu0 0
    %960 = vmatprep.subr.bf16.mxu0 0
    %961 = vmatpush1.bf16.msra.mxu0 0
    %962 = vmatprep.subr.bf16.mxu0 0
    %963 = vmatpush1.bf16.msra.mxu0 0
    %964 = vmatprep.subr.bf16.mxu0 0
    %965 = vmatpush1.bf16.msra.mxu0 0
    %966 = vmatprep.mubr.bf16.mxu0 0
    %967 = vmatmul.mubr.bf16.gmra.mrb[0].mxu0 %v933
    %v968 = vpop.f32.mrb[0].mxu0
    %v969 = vadd.f32 0.0, %v968
    %v970 = vpop.f32.mrb[0].mxu0
    %v971 = vadd.f32 0.0, %v970
    %v972 = vpop.f32.mrb[0].mxu0
    %v973 = vpop.f32.mrb[0].mxu0
    %974 = vdwg.mxu0
    %v977 = vcombine.low %v969, %v971
    %v979 = vunpack.c.l.s4 1983009808
    %v980 = vunpack.c.0.s8 %v979
    %v981 = vlaneseq
    %v982 = vshrl.u32 %v981, 7
    %v983 = vsub.s32 %v980, %v982
    %v984 = vrot.slane %v977, %v983
    %v986 = vadd.f32 %v931, %v984
    %v989 = vunpack.c.l.s4 1983009808
    %v990 = vunpack.c.0.s8 %v989
    %v991 = vlaneseq
    %v992 = vshrl.u32 %v991, 7
    %v993 = vsub.s32 %v990, %v992
    %v994 = vrot.slane %v986, %v993
    %v995 = vcombine.high %v994, %v994
    %v998 = vpack.c.bf16 %v994, %v994
    %v999 = vpack.c.bf16 %v995, %v995
    %1000 = vmatprep.subr.bf16.mxu0 0
    %1001 = vmatpush1.bf16.msra.mxu0 %v192
    %1002 = vmatprep.subr.bf16.mxu0 0
    %1003 = vmatpush1.bf16.msra.mxu0 %v193
    %1004 = vmatprep.subr.bf16.mxu0 0
    %1005 = vmatpush1.bf16.msra.mxu0 %v194
    %1006 = vmatprep.subr.bf16.mxu0 0
    %1007 = vmatpush1.bf16.msra.mxu0 %v195
    %1008 = vmatprep.subr.bf16.mxu0 0
    %1009 = vmatpush1.bf16.msra.mxu0 %v196
    %1010 = vmatprep.subr.bf16.mxu0 0
    %1011 = vmatpush1.bf16.msra.mxu0 %v197
    %1012 = vmatprep.subr.bf16.mxu0 0
    %1013 = vmatpush1.bf16.msra.mxu0 %v198
    %1014 = vmatprep.subr.bf16.mxu0 0
    %1015 = vmatpush1.bf16.msra.mxu0 %v199
    %1016 = vmatprep.subr.bf16.mxu0 0
    %1017 = vmatpush1.bf16.msra.mxu0 %v200
    %1018 = vmatprep.subr.bf16.mxu0 0
    %1019 = vmatpush1.bf16.msra.mxu0 %v201
    %1020 = vmatprep.subr.bf16.mxu0 0
    %1021 = vmatpush1.bf16.msra.mxu0 %v202
    %1022 = vmatprep.subr.bf16.mxu0 0
    %1023 = vmatpush1.bf16.msra.mxu0 %v203
    %1024 = vmatprep.subr.bf16.mxu0 0
    %1025 = vmatpush1.bf16.msra.mxu0 %v204
    %1026 = vmatprep.subr.bf16.mxu0 0
    %1027 = vmatpush1.bf16.msra.mxu0 %v205
    %1028 = vmatprep.subr.bf16.mxu0 0
    %1029 = vmatpush1.bf16.msra.mxu0 %v206
    %1030 = vmatprep.subr.bf16.mxu0 0
    %1031 = vmatpush1.bf16.msra.mxu0 %v207
    %1032 = vmatprep.mubr.bf16.mxu0 %v999
    %1033 = vmatmul.mubr.bf16.gmra.mrb[0].mxu0 %v998
    %v1034 = vpop.f32.mrb[0].mxu0
    %v1035 = vadd.f32 0.0, %v1034
    %v1036 = vpop.f32.mrb[0].mxu0
    %v1037 = vpop.f32.mrb[0].mxu0
    %v1038 = vpop.f32.mrb[0].mxu0
    %1039 = vdwg.mxu0
    %v1040 = vadd.f32 %v1035, %v111
    %v1041 = vtanh.pop %v1040
    %v1042 = vadd.f32 %v1035, %v113
    %v1043 = vtanh.pop %v1042
    %v1044 = vsub.f32 %v1043, %v1041
    %v1045 = vmul.f32 %v1044, 15.0
    %v1046 = vadd.f32 %v1041, %v1045
    %v1047 = vmul.f32 %v986, 0.8062258
    %v1048 = vmul.f32 %v1046, -0.35
    %v1049 = vpack.c.bf16 %v1048, %v1048
    %1050 = vmatprep.subr.bf16.mxu0 %v323
    %1051 = vmatpush1.bf16.msra.mxu0 %v322
    %1052 = vmatprep.subr.bf16.mxu0 %v325
    %1053 = vmatpush1.bf16.msra.mxu0 %v324
    %1054 = vmatprep.subr.bf16.mxu0 %v327
    %1055 = vmatpush1.bf16.msra.mxu0 %v326
    %1056 = vmatprep.subr.bf16.mxu0 %v329
    %1057 = vmatpush1.bf16.msra.mxu0 %v328
    %1058 = vmatprep.subr.bf16.mxu0 %v331
    %1059 = vmatpush1.bf16.msra.mxu0 %v330
    %1060 = vmatprep.subr.bf16.mxu0 %v333
    %1061 = vmatpush1.bf16.msra.mxu0 %v332
    %1062 = vmatprep.subr.bf16.mxu0 %v335
    %1063 = vmatpush1.bf16.msra.mxu0 %v334
    %1064 = vmatprep.subr.bf16.mxu0 %v337
    %1065 = vmatpush1.bf16.msra.mxu0 %v336
    %1066 = vmatprep.subr.bf16.mxu0 0
    %1067 = vmatpush1.bf16.msra.mxu0 0
    %1068 = vmatprep.subr.bf16.mxu0 0
    %1069 = vmatpush1.bf16.msra.mxu0 0
    %1070 = vmatprep.subr.bf16.mxu0 0
    %1071 = vmatpush1.bf16.msra.mxu0 0
    %1072 = vmatprep.subr.bf16.mxu0 0
    %1073 = vmatpush1.bf16.msra.mxu0 0
    %1074 = vmatprep.subr.bf16.mxu0 0
    %1075 = vmatpush1.bf16.msra.mxu0 0
    %1076 = vmatprep.subr.bf16.mxu0 0
    %1077 = vmatpush1.bf16.msra.mxu0 0
    %1078 = vmatprep.subr.bf16.mxu0 0
    %1079 = vmatpush1.bf16.msra.mxu0 0
    %1080 = vmatprep.subr.bf16.mxu0 0
    %1081 = vmatpush1.bf16.msra.mxu0 0
    %1082 = vmatprep.mubr.bf16.mxu0 0
    %1083 = vmatmul.mubr.bf16.gmra.mrb[0].mxu0 %v1049
    %v1084 = vpop.f32.mrb[0].mxu0
    %v1085 = vadd.f32 0.0, %v1084
    %v1086 = vpop.f32.mrb[0].mxu0
    %v1087 = vadd.f32 0.0, %v1086
    %v1088 = vpop.f32.mrb[0].mxu0
    %v1089 = vpop.f32.mrb[0].mxu0
    %1090 = vdwg.mxu0
    %v1093 = vcombine.low %v1085, %v1087
    %v1095 = vunpack.c.l.s4 1983009808
    %v1096 = vunpack.c.0.s8 %v1095
    %v1097 = vlaneseq
    %v1098 = vshrl.u32 %v1097, 7
    %v1099 = vsub.s32 %v1096, %v1098
    %v1100 = vrot.slane %v1093, %v1099
    %v1102 = vadd.f32 %v1047, %v1100
    %v1105 = vunpack.c.l.s4 1983009808
    %v1106 = vunpack.c.0.s8 %v1105
    %v1107 = vlaneseq
    %v1108 = vshrl.u32 %v1107, 7
    %v1109 = vsub.s32 %v1106, %v1108
    %v1110 = vrot.slane %v1102, %v1109
    %v1111 = vcombine.high %v1110, %v1110
    %v1114 = vpack.c.bf16 %v1110, %v1110
    %v1115 = vpack.c.bf16 %v1111, %v1111
    %1116 = vmatprep.subr.bf16.mxu0 0
    %1117 = vmatpush1.bf16.msra.mxu0 %v192
    %1118 = vmatprep.subr.bf16.mxu0 0
    %1119 = vmatpush1.bf16.msra.mxu0 %v193
    %1120 = vmatprep.subr.bf16.mxu0 0
    %1121 = vmatpush1.bf16.msra.mxu0 %v194
    %1122 = vmatprep.subr.bf16.mxu0 0
    %1123 = vmatpush1.bf16.msra.mxu0 %v195
    %1124 = vmatprep.subr.bf16.mxu0 0
    %1125 = vmatpush1.bf16.msra.mxu0 %v196
    %1126 = vmatprep.subr.bf16.mxu0 0
    %1127 = vmatpush1.bf16.msra.mxu0 %v197
    %1128 = vmatprep.subr.bf16.mxu0 0
    %1129 = vmatpush1.bf16.msra.mxu0 %v198
    %1130 = vmatprep.subr.bf16.mxu0 0
    %1131 = vmatpush1.bf16.msra.mxu0 %v199
    %1132 = vmatprep.subr.bf16.mxu0 0
    %1133 = vmatpush1.bf16.msra.mxu0 %v200
    %1134 = vmatprep.subr.bf16.mxu0 0
    %1135 = vmatpush1.bf16.msra.mxu0 %v201
    %1136 = vmatprep.subr.bf16.mxu0 0
    %1137 = vmatpush1.bf16.msra.mxu0 %v202
    %1138 = vmatprep.subr.bf16.mxu0 0
    %1139 = vmatpush1.bf16.msra.mxu0 %v203
    %1140 = vmatprep.subr.bf16.mxu0 0
    %1141 = vmatpush1.bf16.msra.mxu0 %v204
    %1142 = vmatprep.subr.bf16.mxu0 0
    %1143 = vmatpush1.bf16.msra.mxu0 %v205
    %1144 = vmatprep.subr.bf16.mxu0 0
    %1145 = vmatpush1.bf16.msra.mxu0 %v206
    %1146 = vmatprep.subr.bf16.mxu0 0
    %1147 = vmatpush1.bf16.msra.mxu0 %v207
    %1148 = vmatprep.mubr.bf16.mxu0 %v1115
    %1149 = vmatmul.mubr.bf16.gmra.mrb[0].mxu0 %v1114
    %v1150 = vpop.f32.mrb[0].mxu0
    %v1151 = vadd.f32 0.0, %v1150
    %v1152 = vpop.f32.mrb[0].mxu0
    %v1153 = vpop.f32.mrb[0].mxu0
    %v1154 = vpop.f32.mrb[0].mxu0
    %1155 = vdwg.mxu0
    %v1156 = vadd.f32 %v1151, %v111
    %v1157 = vtanh.pop %v1156
    %v1158 = vadd.f32 %v1151, %v113
    %v1159 = vtanh.pop %v1158
    %v1160 = vsub.f32 %v1159, %v1157
    %v1161 = vmul.f32 %v1160, 15.0
    %v1162 = vadd.f32 %v1157, %v1161
    %v1163 = vmul.f32 %v1102, 0.7745967
    %v1164 = vmul.f32 %v1162, -0.4
    %v1165 = vpack.c.bf16 %v1164, %v1164
    %1166 = vmatprep.subr.bf16.mxu0 %v323
    %1167 = vmatpush1.bf16.msra.mxu0 %v322
    %1168 = vmatprep.subr.bf16.mxu0 %v325
    %1169 = vmatpush1.bf16.msra.mxu0 %v324
    %1170 = vmatprep.subr.bf16.mxu0 %v327
    %1171 = vmatpush1.bf16.msra.mxu0 %v326
    %1172 = vmatprep.subr.bf16.mxu0 %v329
    %1173 = vmatpush1.bf16.msra.mxu0 %v328
    %1174 = vmatprep.subr.bf16.mxu0 %v331
    %1175 = vmatpush1.bf16.msra.mxu0 %v330
    %1176 = vmatprep.subr.bf16.mxu0 %v333
    %1177 = vmatpush1.bf16.msra.mxu0 %v332
    %1178 = vmatprep.subr.bf16.mxu0 %v335
    %1179 = vmatpush1.bf16.msra.mxu0 %v334
    %1180 = vmatprep.subr.bf16.mxu0 %v337
    %1181 = vmatpush1.bf16.msra.mxu0 %v336
    %1182 = vmatprep.subr.bf16.mxu0 0
    %1183 = vmatpush1.bf16.msra.mxu0 0
    %1184 = vmatprep.subr.bf16.mxu0 0
    %1185 = vmatpush1.bf16.msra.mxu0 0
    %1186 = vmatprep.subr.bf16.mxu0 0
    %1187 = vmatpush1.bf16.msra.mxu0 0
    %1188 = vmatprep.subr.bf16.mxu0 0
    %1189 = vmatpush1.bf16.msra.mxu0 0
    %1190 = vmatprep.subr.bf16.mxu0 0
    %1191 = vmatpush1.bf16.msra.mxu0 0
    %1192 = vmatprep.subr.bf16.mxu0 0
    %1193 = vmatpush1.bf16.msra.mxu0 0
    %1194 = vmatprep.subr.bf16.mxu0 0
    %1195 = vmatpush1.bf16.msra.mxu0 0
    %1196 = vmatprep.subr.bf16.mxu0 0
    %1197 = vmatpush1.bf16.msra.mxu0 0
    %1198 = vmatprep.mubr.bf16.mxu0 0
    %1199 = vmatmul.mubr.bf16.gmra.mrb[0].mxu0 %v1165
    %v1200 = vpop.f32.mrb[0].mxu0
    %v1201 = vadd.f32 0.0, %v1200
    %v1202 = vpop.f32.mrb[0].mxu0
    %v1203 = vadd.f32 0.0, %v1202
    %v1204 = vpop.f32.mrb[0].mxu0
    %v1205 = vpop.f32.mrb[0].mxu0
    %1206 = vdwg.mxu0
    %v1209 = vcombine.low %v1201, %v1203
    %v1211 = vunpack.c.l.s4 1983009808
    %v1212 = vunpack.c.0.s8 %v1211
    %v1213 = vlaneseq
    %v1214 = vshrl.u32 %v1213, 7
    %v1215 = vsub.s32 %v1212, %v1214
    %v1216 = vrot.slane %v1209, %v1215
    %v1218 = vadd.f32 %v1163, %v1216
    %s1219 = sld [smem:[#allocation8 + $0x200]]
    %s1220 = sld [smem:[#allocation8]]
    %v1221 = vstv %s1220
    %v1222 = vmul.f32 %v1221, %v1218
    %v1223 = vstv %s1219
    %v1224 = vadd.f32 %v1223, %v1222
    %s1225 = sld [smem:[#allocation8 + $0x80]]
    %v1226 = vstv %s1225
    %v1227 = vmul.f32 %v1226, %v1218
    %1229 = vrot.lane.b32.xlu0 %v1227, 64
    %v1230 = vpop.permute.xlu0 %1229
    %v1232 = vadd.f32 %v1224, %v1230
    %s1233 = sld [smem:[#allocation8 + $0x100]]
    %v1234 = vstv %s1233
    %v1236 = vrot.slane %v1218, 2
    %v1238 = vmul.f32 %v1234, %v1236
    %v1239 = vadd.f32 %v1232, %v1238
    %s1240 = sld [smem:[#allocation8 + $0x180]]
    %v1241 = vstv %s1240
    %1242 = vrot.lane.b32.xlu0 %v1218, 64
    %v1243 = vpop.permute.xlu0 %1242
    %v1244 = vrot.slane %v1243, 2
    %v1246 = vmul.f32 %v1241, %v1244
    %v1247 = vadd.f32 %v1239, %v1246
    %s1248 = sld [smem:[#allocation8 + $0x201]]
    %s1249 = sld [smem:[#allocation8 + $0x1]]
    %v1250 = vstv %s1249
    %v1251 = vmul.f32 %v1250, %v1218
    %v1252 = vstv %s1248
    %v1253 = vadd.f32 %v1252, %v1251
    %s1254 = sld [smem:[#allocation8 + $0x81]]
    %v1255 = vstv %s1254
    %v1256 = vmul.f32 %v1255, %v1218
    %1258 = vrot.lane.b32.xlu0 %v1256, 64
    %v1259 = vpop.permute.xlu0 %1258
    %v1261 = vadd.f32 %v1253, %v1259
    %s1262 = sld [smem:[#allocation8 + $0x101]]
    %v1263 = vstv %s1262
    %v1264 = vmul.f32 %v1263, %v1236
    %v1265 = vadd.f32 %v1261, %v1264
    %s1266 = sld [smem:[#allocation8 + $0x181]]
    %v1267 = vstv %s1266
    %v1268 = vmul.f32 %v1267, %v1244
    %v1269 = vadd.f32 %v1265, %v1268
    %s1270 = sld [smem:[#allocation8 + $0x202]]
    %s1271 = sld [smem:[#allocation8 + $0x2]]
    %v1272 = vstv %s1271
    %v1273 = vmul.f32 %v1272, %v1218
    %v1274 = vstv %s1270
    %v1275 = vadd.f32 %v1274, %v1273
    %s1276 = sld [smem:[#allocation8 + $0x82]]
    %v1277 = vstv %s1276
    %v1278 = vmul.f32 %v1277, %v1218
    %1280 = vrot.lane.b32.xlu0 %v1278, 64
    %v1281 = vpop.permute.xlu0 %1280
    %v1283 = vadd.f32 %v1275, %v1281
    %s1284 = sld [smem:[#allocation8 + $0x102]]
    %v1285 = vstv %s1284
    %v1286 = vmul.f32 %v1285, %v1236
    %v1287 = vadd.f32 %v1283, %v1286
    %s1288 = sld [smem:[#allocation8 + $0x182]]
    %v1289 = vstv %s1288
    %v1290 = vmul.f32 %v1289, %v1244
    %v1291 = vadd.f32 %v1287, %v1290
    %v1292 = vsub.f32 0.0, %v1247
    %v1293 = vsub.f32 0.0, %v1269
    %v1294 = vsub.f32 0.0, %v1291
    %v1295 = vmul.f32 %v1292, 1.442695
    %v1296 = vpow.pop %v1295
    %v1297 = vmul.f32 %v1293, 1.442695
    %v1298 = vpow.pop %v1297
    %v1299 = vmul.f32 %v1294, 1.442695
    %v1300 = vpow.pop %v1299
    %v1301 = vadd.f32 %v1296, 1.0
    %v1302 = vadd.f32 %v1298, 1.0
    %v1303 = vadd.f32 %v1300, 1.0
    %v1304 = vrcp.pop %v1301
    %v1305 = vrcp.pop %v1302
    %v1306 = vrcp.pop %v1303
    %v1307 = vmin.f32 %v1304, 1.0
    %v1308 = vmin.f32 %v1305, 1.0
    %v1309 = vmin.f32 %v1306, 1.0
    %vm1310 = vcmask 517120
    %1311 = vst.msk [vmem:[#allocation9] sm:$0x3] %vm1310, %v1307
    %1312 = vst.msk [vmem:[#allocation9 + $0x2] sm:$0x3] %vm1310, %v1308
    %1313 = vst.msk [vmem:[#allocation9 + $0x4] sm:$0x3] %vm1310, %v1309
    // Predicated region
    $region34: #{tpu_custom_call.1} parent=1 // pred_check
      _
    $region35: #{tpu_custom_call.1} parent=1 // pred_check_branch
      %1315 = sbr.rel (0) target = $region37
    $region36: #{tpu_custom_call.1} parent=1 // pred_region
      %s1317 = ssub.s32 96, 96
      %1318 = vsyncadd [#allocation4], %s1317
      %s1319 = sshll.u32 [#allocation9], 4
      %s1320 = int_to_ptr.vmem [resolvable:$true] %s1319
      %1325 = dma.vmem_to_hbm [thread:$0]  %s1320, 96, %s5, [#allocation4], 32, 32, 2
    $region37: #{tpu_custom_call.1} parent=1 // pred_fallthru
      _
    // Predicated region
    $region38: #{tpu_custom_call.1} parent=1 // pred_check
      _
    $region39: #{tpu_custom_call.1} parent=1 // pred_check_branch
      %1327 = sbr.rel (0) target = $region41
    $region40: #{tpu_custom_call.1} parent=1 // pred_region
      %1328 = dma.done [#allocation4], 96
    $region41: #{tpu_custom_call.1} parent=1 // pred_fallthru
      _
    %1329 = vsyncpa [#allocation3], 1
    %1330 = vsyncpa [#allocation7], 1
    %1331 = vsyncpa [#allocation4], 1
    %1332 = vsyncpa [#allocation5], 1

</llo_original>
